<compile_context>
chip_gen: v7x
topology: tpu7x:2x2x1
jax: 0.10.0
libtpu: 0.0.40
codegen_flags: <defaults>
</compile_context>

<pallas_src>
import jax
import jax.numpy as jnp
from jax.experimental import pallas as pl
from jax.experimental.pallas import tpu as pltpu

# Shapes consistent with the module's query/value tensors: (1, 8, 64, 64)
B, H, SQ, SK, D = 1, 8, 64, 64, 64
INV_SCALE_FACTOR = 8.0          # sqrt(head_dim)
DROPOUT_P = 0.0


def attention_kernel(q_ref, k_ref, v_ref, o_ref):
    # Whole problem is VMEM-resident: refs are (B*H, S, D) arrays.
    q = q_ref[...].astype(jnp.float32)            # (BH, SQ, D)
    k = k_ref[...].astype(jnp.float32)            # (BH, SK, D)
    v = v_ref[...].astype(jnp.float32)            # (BH, SK, Dv)

    # qk = q @ k^T: contract the last axes of both operands so the MXU
    # consumes K directly (no transpose materialization).
    s = jnp.einsum("hqd,hkd->hqk", q, k,
                   preferred_element_type=jnp.float32)    # (BH, SQ, SK)
    s = s * (1.0 / INV_SCALE_FACTOR)

    # Numerically-stable softmax along the last axis (exact division; the
    # approx EUP reciprocal saves nothing here and costs accuracy).
    m = jnp.max(s, axis=-1, keepdims=True)
    e = jnp.exp(s - m)
    denom = jnp.sum(e, axis=-1, keepdims=True)
    p = e / denom

    # dropout_p == 0.0 -> identity (deterministic, eval-mode behavior)

    # output = p @ v
    out = jnp.einsum("hqk,hkd->hqd", p, v,
                     preferred_element_type=jnp.float32)  # (BH, SQ, Dv)
    o_ref[...] = out.astype(o_ref.dtype)


def scaled_dot_product_attention(query, key, value):
    """query: (B,H,SQ,D), key: (B,H,SK,D), value: (B,H,SK,Dv)."""
    b, h, sq, d = query.shape
    sk = key.shape[2]
    dv = value.shape[3]
    bh = b * h

    # Collapse (batch, head) into one leading axis (free, contiguous reshape)
    # so the kernel sees plain 3-D arrays.  No grid: a single one-shot kernel
    # with all operands whole-array VMEM-resident is the smallest-latency form
    # for this overhead-bound size on v5e/v6e/v7x.
    q3 = query.reshape(bh, sq, d)
    k3 = key.reshape(bh, sk, d)
    v3 = value.reshape(bh, sk, dv)

    out3 = pl.pallas_call(
        attention_kernel,
        out_shape=jax.ShapeDtypeStruct((bh, sq, dv), query.dtype),
        in_specs=[
            pl.BlockSpec(memory_space=pltpu.MemorySpace.VMEM),
            pl.BlockSpec(memory_space=pltpu.MemorySpace.VMEM),
            pl.BlockSpec(memory_space=pltpu.MemorySpace.VMEM),
        ],
        out_specs=pl.BlockSpec(memory_space=pltpu.MemorySpace.VMEM),
    )(q3, k3, v3)

    return out3.reshape(b, h, sq, dv)


def reference(query, key, value):
    s = jnp.einsum("bhqd,bhkd->bhqk", query, key) / INV_SCALE_FACTOR
    p = jax.nn.softmax(s, axis=-1)
    return jnp.einsum("bhqk,bhkd->bhqd", p, value)


if __name__ == "__main__":
    key0 = jax.random.PRNGKey(0)
    kq, kk, kv = jax.random.split(key0, 3)
    query = jax.random.normal(kq, (B, H, SQ, D), dtype=jnp.float32)
    key_t = jax.random.normal(kk, (B, H, SK, D), dtype=jnp.float32)
    value = jax.random.normal(kv, (B, H, SK, D), dtype=jnp.float32)

    out = scaled_dot_product_attention(query, key_t, value)
    out = jax.block_until_ready(out)

    ref = reference(query, key_t, value)
    assert out.shape == (B, H, SQ, D)
    # Exact-division softmax restores tight parity with the XLA reference.
    assert jnp.allclose(out, ref, atol=1e-5, rtol=1e-5), float(
        jnp.max(jnp.abs(out - ref)))

    print("KERNEL_OK")
</pallas_src>

<mosaic_0001>
module attributes {stable_mosaic.version = 11 : i64} {
  func.func @attention_kernel(%arg0: memref<8x64x64xf32, #tpu.memory_space<vmem>>, %arg1: memref<8x64x64xf32, #tpu.memory_space<vmem>>, %arg2: memref<8x64x64xf32, #tpu.memory_space<vmem>>, %arg3: memref<8x64x64xf32, #tpu.memory_space<vmem>>) attributes {dimension_semantics = [], scalar_prefetch = 0 : i64, scratch_operands = 0 : i64, tpu.core_type = #tpu.core_type<tc>} {
    %c0 = arith.constant 0 : index
    %c0_0 = arith.constant 0 : index
    %c0_1 = arith.constant 0 : index
    %0 = vector.load %arg0[%c0, %c0_0, %c0_1] : memref<8x64x64xf32, #tpu.memory_space<vmem>>, vector<8x64x64xf32>
    %c0_2 = arith.constant 0 : index
    %c0_3 = arith.constant 0 : index
    %c0_4 = arith.constant 0 : index
    %1 = vector.load %arg1[%c0_2, %c0_3, %c0_4] : memref<8x64x64xf32, #tpu.memory_space<vmem>>, vector<8x64x64xf32>
    %c0_5 = arith.constant 0 : index
    %c0_6 = arith.constant 0 : index
    %c0_7 = arith.constant 0 : index
    %2 = vector.load %arg2[%c0_5, %c0_6, %c0_7] : memref<8x64x64xf32, #tpu.memory_space<vmem>>, vector<8x64x64xf32>
    "tpu.trace_start"() <{level = 10 : i32, message = "hqd,hkd->hqk"}> : () -> ()
    %cst = arith.constant dense<0.000000e+00> : vector<8x64x64xf32>
    %3 = tpu.matmul %0, %1, %cst {dimension_numbers = #tpu.dot_dimension_numbers<[2], [2], [1], [1], [0, 0, 0, 1, 1, 1], [0], [0]>} : vector<8x64x64xf32>, vector<8x64x64xf32>, vector<8x64x64xf32> -> vector<8x64x64xf32>
    "tpu.trace_stop"() : () -> ()
    %cst_8 = arith.constant 1.250000e-01 : f32
    %4 = vector.broadcast %cst_8 : f32 to vector<8x64x64xf32>
    %5 = arith.mulf %3, %4 : vector<8x64x64xf32>
    %cst_9 = arith.constant dense<0xFF800000> : vector<8x64xf32>
    %6 = vector.multi_reduction <maximumf>, %5, %cst_9 [2] : vector<8x64x64xf32> to vector<8x64xf32>
    %7 = vector.shape_cast %6 : vector<8x64xf32> to vector<8x64x1xf32>
    %8 = vector.broadcast %7 : vector<8x64x1xf32> to vector<8x64x64xf32>
    %9 = arith.subf %5, %8 : vector<8x64x64xf32>
    %10 = math.exp %9 : vector<8x64x64xf32>
    %cst_10 = arith.constant dense<0.000000e+00> : vector<8x64xf32>
    %11 = vector.multi_reduction <add>, %10, %cst_10 [2] : vector<8x64x64xf32> to vector<8x64xf32>
    %12 = vector.shape_cast %11 : vector<8x64xf32> to vector<8x64x1xf32>
    %13 = vector.broadcast %12 : vector<8x64x1xf32> to vector<8x64x64xf32>
    %14 = arith.divf %10, %13 : vector<8x64x64xf32>
    "tpu.trace_start"() <{level = 10 : i32, message = "hqk,hkd->hqd"}> : () -> ()
    %cst_11 = arith.constant dense<0.000000e+00> : vector<8x64x64xf32>
    %15 = tpu.matmul %14, %2, %cst_11 {dimension_numbers = #tpu.dot_dimension_numbers<[2], [1], [1], [2], [0, 0, 0, 1, 1, 2], [0], [0]>} : vector<8x64x64xf32>, vector<8x64x64xf32>, vector<8x64x64xf32> -> vector<8x64x64xf32>
    "tpu.trace_stop"() : () -> ()
    %c0_12 = arith.constant 0 : index
    %c0_13 = arith.constant 0 : index
    %c0_14 = arith.constant 0 : index
    %16 = vector.load %arg3[%c0_12, %c0_13, %c0_14] : memref<8x64x64xf32, #tpu.memory_space<vmem>>, vector<8x64x64xf32>
    tpu.vector_store %arg3[%c0_12, %c0_13, %c0_14], %15 {strides = array<i32>} : memref<8x64x64xf32, #tpu.memory_space<vmem>>, vector<8x64x64xf32>,
    return
  }
}

</mosaic_0001>

<llo_original>
// kernel: tpu_custom_call.1
$region0: #{tpu_custom_call.1}
  #allocation0 [shape = 'u32[]', space=smem, size = 0x4, offset = 0x4, fixed_abs, tag = 'smem constant byte address 0x4 - core index']
  #allocation1 [shape = 'u32[144,128]{1,0:T(1,128)}', space=vmem, size = 0x12000, scoped, tag = 'internal scratch']
  %s0 = inlined_call_operand.hbm [shape: f32[8,64,64], index: 0, kind: input, shape index: {}]
  %s1 = inlined_call_operand.hbm [shape: f32[8,64,64], index: 1, kind: input, shape index: {}]
  %s2 = inlined_call_operand.hbm [shape: f32[8,64,64], index: 2, kind: input, shape index: {}]
  %s3 = inlined_call_operand.hbm [shape: f32[8,64,64], index: 3, kind: output, shape index: {}]
  %s4 = sld [smem:[#allocation0]]
  $region34: #{tpu_custom_call.1} parent=0
    _
  %s6 = ssub.s32 1, %s4
  %s7 = scalar_select 0, %s6, %s4
  $region1: #{tpu_custom_call.1} parent=0
    #allocation2 [shape = 'u8[262144]{0}', space=vmem, size = 0x40000, scoped, tag = 'input window, operand 0, single buffered']
    #allocation3 [shape = 's32[1]{0}', space=sflag, size = 0x4, scoped, tag = 'scoped memory for tpu_custom_call.1']
    #allocation4 [shape = 's32[1]{0}', space=sflag, size = 0x4, scoped, tag = 'scoped memory for tpu_custom_call.1']
    #allocation5 [shape = 'u8[262144]{0}', space=vmem, size = 0x40000, scoped, tag = 'input window, operand 1, single buffered']
    #allocation6 [shape = 's32[1]{0}', space=sflag, size = 0x4, scoped, tag = 'scoped memory for tpu_custom_call.1']
    #allocation7 [shape = 'u8[262144]{0}', space=vmem, size = 0x40000, scoped, tag = 'input window, operand 2, single buffered']
    #allocation8 [shape = 'u8[262144]{0}', space=vmem, size = 0x40000, scoped, tag = 'output window, operand 0, single buffered']
    %8 = vsyncpa [#allocation3], 0
    %9 = vsyncpa [#allocation6], 0
    %10 = vsyncpa [#allocation4], 0
    // Predicated region
    $region2: #{tpu_custom_call.1} parent=1 // pred_check
      _
    $region3: #{tpu_custom_call.1} parent=1 // pred_check_branch
      %12 = sbr.rel (0) target = $region5
    $region4: #{tpu_custom_call.1} parent=1 // pred_region
      %s14 = ssub.s32 8192, 8192
      %15 = vsyncadd [#allocation3], %s14
      %s16 = sshll.u32 [#allocation2], 4
      %s17 = int_to_ptr.vmem [resolvable:$true] %s16
      %22 = dma.hbm_to_vmem [thread:$0]  %s0, 8192, %s17, [#allocation3], 128, 128, 8
    $region5: #{tpu_custom_call.1} parent=1 // pred_fallthru
      _
    // Predicated region
    $region6: #{tpu_custom_call.1} parent=1 // pred_check
      _
    $region7: #{tpu_custom_call.1} parent=1 // pred_check_branch
      %24 = sbr.rel (0) target = $region9
    $region8: #{tpu_custom_call.1} parent=1 // pred_region
      %s26 = ssub.s32 8192, 8192
      %27 = vsyncadd [#allocation6], %s26
      %s28 = sshll.u32 [#allocation5], 4
      %s29 = int_to_ptr.vmem [resolvable:$true] %s28
      %34 = dma.hbm_to_vmem [thread:$0]  %s1, 8192, %s29, [#allocation6], 128, 128, 8
    $region9: #{tpu_custom_call.1} parent=1 // pred_fallthru
      _
    // Predicated region
    $region10: #{tpu_custom_call.1} parent=1 // pred_check
      _
    $region11: #{tpu_custom_call.1} parent=1 // pred_check_branch
      %36 = sbr.rel (0) target = $region13
    $region12: #{tpu_custom_call.1} parent=1 // pred_region
      %s38 = ssub.s32 8192, 8192
      %39 = vsyncadd [#allocation6], %s38
      %s40 = sshll.u32 [#allocation7], 4
      %s41 = int_to_ptr.vmem [resolvable:$true] %s40
      %46 = dma.hbm_to_vmem [thread:$0]  %s2, 8192, %s41, [#allocation6], 128, 128, 8
    $region13: #{tpu_custom_call.1} parent=1 // pred_fallthru
      _
    // Predicated region
    $region14: #{tpu_custom_call.1} parent=1 // pred_check
      _
    $region15: #{tpu_custom_call.1} parent=1 // pred_check_branch
      %48 = sbr.rel (0) target = $region17
    $region16: #{tpu_custom_call.1} parent=1 // pred_region
      %49 = dma.done [#allocation3], 8192
    $region17: #{tpu_custom_call.1} parent=1 // pred_fallthru
      _
    // Predicated region
    $region18: #{tpu_custom_call.1} parent=1 // pred_check
      _
    $region19: #{tpu_custom_call.1} parent=1 // pred_check_branch
      %51 = sbr.rel (0) target = $region21
    $region20: #{tpu_custom_call.1} parent=1 // pred_region
      %52 = dma.done [#allocation6], 8192
    $region21: #{tpu_custom_call.1} parent=1 // pred_fallthru
      _
    // Predicated region
    $region22: #{tpu_custom_call.1} parent=1 // pred_check
      _
    $region23: #{tpu_custom_call.1} parent=1 // pred_check_branch
      %54 = sbr.rel (0) target = $region25
    $region24: #{tpu_custom_call.1} parent=1 // pred_region
      %55 = dma.done [#allocation6], 8192
    $region25: #{tpu_custom_call.1} parent=1 // pred_fallthru
      _
    %v56 = vld [vmem:[#allocation2] sm:$0xff]
    %v57 = vld [vmem:[#allocation2 + $0x8] sm:$0xff]
    %v58 = vld [vmem:[#allocation2 + $0x10] sm:$0xff]
    %v59 = vld [vmem:[#allocation2 + $0x18] sm:$0xff]
    %v60 = vld [vmem:[#allocation2 + $0x20] sm:$0xff]
    %v61 = vld [vmem:[#allocation2 + $0x28] sm:$0xff]
    %v62 = vld [vmem:[#allocation2 + $0x30] sm:$0xff]
    %v63 = vld [vmem:[#allocation2 + $0x38] sm:$0xff]
    %v64 = vld [vmem:[#allocation2 + $0x40] sm:$0xff]
    %v65 = vld [vmem:[#allocation2 + $0x48] sm:$0xff]
    %v66 = vld [vmem:[#allocation2 + $0x50] sm:$0xff]
    %v67 = vld [vmem:[#allocation2 + $0x58] sm:$0xff]
    %v68 = vld [vmem:[#allocation2 + $0x60] sm:$0xff]
    %v69 = vld [vmem:[#allocation2 + $0x68] sm:$0xff]
    %v70 = vld [vmem:[#allocation2 + $0x70] sm:$0xff]
    %v71 = vld [vmem:[#allocation2 + $0x78] sm:$0xff]
    %v72 = vld [vmem:[#allocation2 + $0x80] sm:$0xff]
    %v73 = vld [vmem:[#allocation2 + $0x88] sm:$0xff]
    %v74 = vld [vmem:[#allocation2 + $0x90] sm:$0xff]
    %v75 = vld [vmem:[#allocation2 + $0x98] sm:$0xff]
    %v76 = vld [vmem:[#allocation2 + $0xa0] sm:$0xff]
    %v77 = vld [vmem:[#allocation2 + $0xa8] sm:$0xff]
    %v78 = vld [vmem:[#allocation2 + $0xb0] sm:$0xff]
    %v79 = vld [vmem:[#allocation2 + $0xb8] sm:$0xff]
    %v80 = vld [vmem:[#allocation2 + $0xc0] sm:$0xff]
    %v81 = vld [vmem:[#allocation2 + $0xc8] sm:$0xff]
    %v82 = vld [vmem:[#allocation2 + $0xd0] sm:$0xff]
    %v83 = vld [vmem:[#allocation2 + $0xd8] sm:$0xff]
    %v84 = vld [vmem:[#allocation2 + $0xe0] sm:$0xff]
    %v85 = vld [vmem:[#allocation2 + $0xe8] sm:$0xff]
    %v86 = vld [vmem:[#allocation2 + $0xf0] sm:$0xff]
    %v87 = vld [vmem:[#allocation2 + $0xf8] sm:$0xff]
    %v88 = vld [vmem:[#allocation2 + $0x100] sm:$0xff]
    %v89 = vld [vmem:[#allocation2 + $0x108] sm:$0xff]
    %v90 = vld [vmem:[#allocation2 + $0x110] sm:$0xff]
    %v91 = vld [vmem:[#allocation2 + $0x118] sm:$0xff]
    %v92 = vld [vmem:[#allocation2 + $0x120] sm:$0xff]
    %v93 = vld [vmem:[#allocation2 + $0x128] sm:$0xff]
    %v94 = vld [vmem:[#allocation2 + $0x130] sm:$0xff]
    %v95 = vld [vmem:[#allocation2 + $0x138] sm:$0xff]
    %v96 = vld [vmem:[#allocation2 + $0x140] sm:$0xff]
    %v97 = vld [vmem:[#allocation2 + $0x148] sm:$0xff]
    %v98 = vld [vmem:[#allocation2 + $0x150] sm:$0xff]
    %v99 = vld [vmem:[#allocation2 + $0x158] sm:$0xff]
    %v100 = vld [vmem:[#allocation2 + $0x160] sm:$0xff]
    %v101 = vld [vmem:[#allocation2 + $0x168] sm:$0xff]
    %v102 = vld [vmem:[#allocation2 + $0x170] sm:$0xff]
    %v103 = vld [vmem:[#allocation2 + $0x178] sm:$0xff]
    %v104 = vld [vmem:[#allocation2 + $0x180] sm:$0xff]
    %v105 = vld [vmem:[#allocation2 + $0x188] sm:$0xff]
    %v106 = vld [vmem:[#allocation2 + $0x190] sm:$0xff]
    %v107 = vld [vmem:[#allocation2 + $0x198] sm:$0xff]
    %v108 = vld [vmem:[#allocation2 + $0x1a0] sm:$0xff]
    %v109 = vld [vmem:[#allocation2 + $0x1a8] sm:$0xff]
    %v110 = vld [vmem:[#allocation2 + $0x1b0] sm:$0xff]
    %v111 = vld [vmem:[#allocation2 + $0x1b8] sm:$0xff]
    %v112 = vld [vmem:[#allocation2 + $0x1c0] sm:$0xff]
    %v113 = vld [vmem:[#allocation2 + $0x1c8] sm:$0xff]
    %v114 = vld [vmem:[#allocation2 + $0x1d0] sm:$0xff]
    %v115 = vld [vmem:[#allocation2 + $0x1d8] sm:$0xff]
    %v116 = vld [vmem:[#allocation2 + $0x1e0] sm:$0xff]
    %v117 = vld [vmem:[#allocation2 + $0x1e8] sm:$0xff]
    %v118 = vld [vmem:[#allocation2 + $0x1f0] sm:$0xff]
    %v119 = vld [vmem:[#allocation2 + $0x1f8] sm:$0xff]
    %v120 = vld [vmem:[#allocation5] sm:$0xff]
    %v121 = vld [vmem:[#allocation5 + $0x8] sm:$0xff]
    %v122 = vld [vmem:[#allocation5 + $0x10] sm:$0xff]
    %v123 = vld [vmem:[#allocation5 + $0x18] sm:$0xff]
    %v124 = vld [vmem:[#allocation5 + $0x20] sm:$0xff]
    %v125 = vld [vmem:[#allocation5 + $0x28] sm:$0xff]
    %v126 = vld [vmem:[#allocation5 + $0x30] sm:$0xff]
    %v127 = vld [vmem:[#allocation5 + $0x38] sm:$0xff]
    %v128 = vld [vmem:[#allocation5 + $0x40] sm:$0xff]
    %v129 = vld [vmem:[#allocation5 + $0x48] sm:$0xff]
    %v130 = vld [vmem:[#allocation5 + $0x50] sm:$0xff]
    %v131 = vld [vmem:[#allocation5 + $0x58] sm:$0xff]
    %v132 = vld [vmem:[#allocation5 + $0x60] sm:$0xff]
    %v133 = vld [vmem:[#allocation5 + $0x68] sm:$0xff]
    %v134 = vld [vmem:[#allocation5 + $0x70] sm:$0xff]
    %v135 = vld [vmem:[#allocation5 + $0x78] sm:$0xff]
    %v136 = vld [vmem:[#allocation5 + $0x80] sm:$0xff]
    %v137 = vld [vmem:[#allocation5 + $0x88] sm:$0xff]
    %v138 = vld [vmem:[#allocation5 + $0x90] sm:$0xff]
    %v139 = vld [vmem:[#allocation5 + $0x98] sm:$0xff]
    %v140 = vld [vmem:[#allocation5 + $0xa0] sm:$0xff]
    %v141 = vld [vmem:[#allocation5 + $0xa8] sm:$0xff]
    %v142 = vld [vmem:[#allocation5 + $0xb0] sm:$0xff]
    %v143 = vld [vmem:[#allocation5 + $0xb8] sm:$0xff]
    %v144 = vld [vmem:[#allocation5 + $0xc0] sm:$0xff]
    %v145 = vld [vmem:[#allocation5 + $0xc8] sm:$0xff]
    %v146 = vld [vmem:[#allocation5 + $0xd0] sm:$0xff]
    %v147 = vld [vmem:[#allocation5 + $0xd8] sm:$0xff]
    %v148 = vld [vmem:[#allocation5 + $0xe0] sm:$0xff]
    %v149 = vld [vmem:[#allocation5 + $0xe8] sm:$0xff]
    %v150 = vld [vmem:[#allocation5 + $0xf0] sm:$0xff]
    %v151 = vld [vmem:[#allocation5 + $0xf8] sm:$0xff]
    %v152 = vld [vmem:[#allocation5 + $0x100] sm:$0xff]
    %v153 = vld [vmem:[#allocation5 + $0x108] sm:$0xff]
    %v154 = vld [vmem:[#allocation5 + $0x110] sm:$0xff]
    %v155 = vld [vmem:[#allocation5 + $0x118] sm:$0xff]
    %v156 = vld [vmem:[#allocation5 + $0x120] sm:$0xff]
    %v157 = vld [vmem:[#allocation5 + $0x128] sm:$0xff]
    %v158 = vld [vmem:[#allocation5 + $0x130] sm:$0xff]
    %v159 = vld [vmem:[#allocation5 + $0x138] sm:$0xff]
    %v160 = vld [vmem:[#allocation5 + $0x140] sm:$0xff]
    %v161 = vld [vmem:[#allocation5 + $0x148] sm:$0xff]
    %v162 = vld [vmem:[#allocation5 + $0x150] sm:$0xff]
    %v163 = vld [vmem:[#allocation5 + $0x158] sm:$0xff]
    %v164 = vld [vmem:[#allocation5 + $0x160] sm:$0xff]
    %v165 = vld [vmem:[#allocation5 + $0x168] sm:$0xff]
    %v166 = vld [vmem:[#allocation5 + $0x170] sm:$0xff]
    %v167 = vld [vmem:[#allocation5 + $0x178] sm:$0xff]
    %v168 = vld [vmem:[#allocation5 + $0x180] sm:$0xff]
    %v169 = vld [vmem:[#allocation5 + $0x188] sm:$0xff]
    %v170 = vld [vmem:[#allocation5 + $0x190] sm:$0xff]
    %v171 = vld [vmem:[#allocation5 + $0x198] sm:$0xff]
    %v172 = vld [vmem:[#allocation5 + $0x1a0] sm:$0xff]
    %v173 = vld [vmem:[#allocation5 + $0x1a8] sm:$0xff]
    %v174 = vld [vmem:[#allocation5 + $0x1b0] sm:$0xff]
    %v175 = vld [vmem:[#allocation5 + $0x1b8] sm:$0xff]
    %v176 = vld [vmem:[#allocation5 + $0x1c0] sm:$0xff]
    %v177 = vld [vmem:[#allocation5 + $0x1c8] sm:$0xff]
    %v178 = vld [vmem:[#allocation5 + $0x1d0] sm:$0xff]
    %v179 = vld [vmem:[#allocation5 + $0x1d8] sm:$0xff]
    %v180 = vld [vmem:[#allocation5 + $0x1e0] sm:$0xff]
    %v181 = vld [vmem:[#allocation5 + $0x1e8] sm:$0xff]
    %v182 = vld [vmem:[#allocation5 + $0x1f0] sm:$0xff]
    %v183 = vld [vmem:[#allocation5 + $0x1f8] sm:$0xff]
    %v184 = vld [vmem:[#allocation7] sm:$0xff]
    %v185 = vld [vmem:[#allocation7 + $0x8] sm:$0xff]
    %v186 = vld [vmem:[#allocation7 + $0x10] sm:$0xff]
    %v187 = vld [vmem:[#allocation7 + $0x18] sm:$0xff]
    %v188 = vld [vmem:[#allocation7 + $0x20] sm:$0xff]
    %v189 = vld [vmem:[#allocation7 + $0x28] sm:$0xff]
    %v190 = vld [vmem:[#allocation7 + $0x30] sm:$0xff]
    %v191 = vld [vmem:[#allocation7 + $0x38] sm:$0xff]
    %v192 = vld [vmem:[#allocation7 + $0x40] sm:$0xff]
    %v193 = vld [vmem:[#allocation7 + $0x48] sm:$0xff]
    %v194 = vld [vmem:[#allocation7 + $0x50] sm:$0xff]
    %v195 = vld [vmem:[#allocation7 + $0x58] sm:$0xff]
    %v196 = vld [vmem:[#allocation7 + $0x60] sm:$0xff]
    %v197 = vld [vmem:[#allocation7 + $0x68] sm:$0xff]
    %v198 = vld [vmem:[#allocation7 + $0x70] sm:$0xff]
    %v199 = vld [vmem:[#allocation7 + $0x78] sm:$0xff]
    %v200 = vld [vmem:[#allocation7 + $0x80] sm:$0xff]
    %v201 = vld [vmem:[#allocation7 + $0x88] sm:$0xff]
    %v202 = vld [vmem:[#allocation7 + $0x90] sm:$0xff]
    %v203 = vld [vmem:[#allocation7 + $0x98] sm:$0xff]
    %v204 = vld [vmem:[#allocation7 + $0xa0] sm:$0xff]
    %v205 = vld [vmem:[#allocation7 + $0xa8] sm:$0xff]
    %v206 = vld [vmem:[#allocation7 + $0xb0] sm:$0xff]
    %v207 = vld [vmem:[#allocation7 + $0xb8] sm:$0xff]
    %v208 = vld [vmem:[#allocation7 + $0xc0] sm:$0xff]
    %v209 = vld [vmem:[#allocation7 + $0xc8] sm:$0xff]
    %v210 = vld [vmem:[#allocation7 + $0xd0] sm:$0xff]
    %v211 = vld [vmem:[#allocation7 + $0xd8] sm:$0xff]
    %v212 = vld [vmem:[#allocation7 + $0xe0] sm:$0xff]
    %v213 = vld [vmem:[#allocation7 + $0xe8] sm:$0xff]
    %v214 = vld [vmem:[#allocation7 + $0xf0] sm:$0xff]
    %v215 = vld [vmem:[#allocation7 + $0xf8] sm:$0xff]
    %v216 = vld [vmem:[#allocation7 + $0x100] sm:$0xff]
    %v217 = vld [vmem:[#allocation7 + $0x108] sm:$0xff]
    %v218 = vld [vmem:[#allocation7 + $0x110] sm:$0xff]
    %v219 = vld [vmem:[#allocation7 + $0x118] sm:$0xff]
    %v220 = vld [vmem:[#allocation7 + $0x120] sm:$0xff]
    %v221 = vld [vmem:[#allocation7 + $0x128] sm:$0xff]
    %v222 = vld [vmem:[#allocation7 + $0x130] sm:$0xff]
    %v223 = vld [vmem:[#allocation7 + $0x138] sm:$0xff]
    %v224 = vld [vmem:[#allocation7 + $0x140] sm:$0xff]
    %v225 = vld [vmem:[#allocation7 + $0x148] sm:$0xff]
    %v226 = vld [vmem:[#allocation7 + $0x150] sm:$0xff]
    %v227 = vld [vmem:[#allocation7 + $0x158] sm:$0xff]
    %v228 = vld [vmem:[#allocation7 + $0x160] sm:$0xff]
    %v229 = vld [vmem:[#allocation7 + $0x168] sm:$0xff]
    %v230 = vld [vmem:[#allocation7 + $0x170] sm:$0xff]
    %v231 = vld [vmem:[#allocation7 + $0x178] sm:$0xff]
    %v232 = vld [vmem:[#allocation7 + $0x180] sm:$0xff]
    %v233 = vld [vmem:[#allocation7 + $0x188] sm:$0xff]
    %v234 = vld [vmem:[#allocation7 + $0x190] sm:$0xff]
    %v235 = vld [vmem:[#allocation7 + $0x198] sm:$0xff]
    %v236 = vld [vmem:[#allocation7 + $0x1a0] sm:$0xff]
    %v237 = vld [vmem:[#allocation7 + $0x1a8] sm:$0xff]
    %v238 = vld [vmem:[#allocation7 + $0x1b0] sm:$0xff]
    %v239 = vld [vmem:[#allocation7 + $0x1b8] sm:$0xff]
    %v240 = vld [vmem:[#allocation7 + $0x1c0] sm:$0xff]
    %v241 = vld [vmem:[#allocation7 + $0x1c8] sm:$0xff]
    %v242 = vld [vmem:[#allocation7 + $0x1d0] sm:$0xff]
    %v243 = vld [vmem:[#allocation7 + $0x1d8] sm:$0xff]
    %v244 = vld [vmem:[#allocation7 + $0x1e0] sm:$0xff]
    %v245 = vld [vmem:[#allocation7 + $0x1e8] sm:$0xff]
    %v246 = vld [vmem:[#allocation7 + $0x1f0] sm:$0xff]
    %v247 = vld [vmem:[#allocation7 + $0x1f8] sm:$0xff]
    %vm248 = vcmask 523264
    %v250 = vsel %vm248, %v56, 0
    %v253 = vsel %vm248, %v57, 0
    %v256 = vsel %vm248, %v58, 0
    %v259 = vsel %vm248, %v59, 0
    %v262 = vsel %vm248, %v60, 0
    %v265 = vsel %vm248, %v61, 0
    %v268 = vsel %vm248, %v62, 0
    %v271 = vsel %vm248, %v63, 0
    %v274 = vsel %vm248, %v120, 0
    %v277 = vsel %vm248, %v121, 0
    %v280 = vsel %vm248, %v122, 0
    %v283 = vsel %vm248, %v123, 0
    %v286 = vsel %vm248, %v124, 0
    %v289 = vsel %vm248, %v125, 0
    %v292 = vsel %vm248, %v126, 0
    %v295 = vsel %vm248, %v127, 0
    %297 = vmatprep.subr.mxu0 0.0
    %298 = vmatpush1.xpose.msra.mxu0 %v274
    %299 = vmatprep.subr.mxu0 0.0
    %300 = vmatpush1.xpose.msra.mxu0 %v277
    %301 = vmatprep.subr.mxu0 0.0
    %302 = vmatpush1.xpose.msra.mxu0 %v280
    %303 = vmatprep.subr.mxu0 0.0
    %304 = vmatpush1.xpose.msra.mxu0 %v283
    %305 = vmatprep.subr.mxu0 0.0
    %306 = vmatpush1.xpose.msra.mxu0 %v286
    %307 = vmatprep.subr.mxu0 0.0
    %308 = vmatpush1.xpose.msra.mxu0 %v289
    %309 = vmatprep.subr.mxu0 0.0
    %310 = vmatpush1.xpose.msra.mxu0 %v292
    %311 = vmatprep.subr.mxu0 0.0
    %312 = vmatpush1.xpose.msra.mxu0 %v295
    %313 = vmatprep.subr.mxu0 0.0
    %314 = vmatpush1.xpose.msra.mxu0 0.0
    %315 = vmatprep.subr.mxu0 0.0
    %316 = vmatpush1.xpose.msra.mxu0 0.0
    %317 = vmatprep.subr.mxu0 0.0
    %318 = vmatpush1.xpose.msra.mxu0 0.0
    %319 = vmatprep.subr.mxu0 0.0
    %320 = vmatpush1.xpose.msra.mxu0 0.0
    %321 = vmatprep.subr.mxu0 0.0
    %322 = vmatpush1.xpose.msra.mxu0 0.0
    %323 = vmatprep.subr.mxu0 0.0
    %324 = vmatpush1.xpose.msra.mxu0 0.0
    %325 = vmatprep.subr.mxu0 0.0
    %326 = vmatpush1.xpose.msra.mxu0 0.0
    %327 = vmatprep.subr.mxu0 0.0
    %328 = vmatpush1.xpose.msra.mxu0 0.0
    %329 = vmatprep.subr.mxu0 0.0
    %330 = vmatpush1.xpose.msra.mxu0 0.0
    %331 = vmatprep.subr.mxu0 0.0
    %332 = vmatpush1.xpose.msra.mxu0 0.0
    %333 = vmatprep.subr.mxu0 0.0
    %334 = vmatpush1.xpose.msra.mxu0 0.0
    %335 = vmatprep.subr.mxu0 0.0
    %336 = vmatpush1.xpose.msra.mxu0 0.0
    %337 = vmatprep.subr.mxu0 0.0
    %338 = vmatpush1.xpose.msra.mxu0 0.0
    %339 = vmatprep.subr.mxu0 0.0
    %340 = vmatpush1.xpose.msra.mxu0 0.0
    %341 = vmatprep.subr.mxu0 0.0
    %342 = vmatpush1.xpose.msra.mxu0 0.0
    %343 = vmatprep.subr.mxu0 0.0
    %344 = vmatpush1.xpose.msra.mxu0 0.0
    %345 = vmatprep.subr.mxu0 0.0
    %346 = vmatpush1.xpose.msra.mxu0 0.0
    %347 = vmatprep.subr.mxu0 0.0
    %348 = vmatpush1.xpose.msra.mxu0 0.0
    %349 = vmatprep.subr.mxu0 0.0
    %350 = vmatpush1.xpose.msra.mxu0 0.0
    %351 = vmatprep.subr.mxu0 0.0
    %352 = vmatpush1.xpose.msra.mxu0 0.0
    %353 = vmatprep.subr.mxu0 0.0
    %354 = vmatpush1.xpose.msra.mxu0 0.0
    %355 = vmatprep.subr.mxu0 0.0
    %356 = vmatpush1.xpose.msra.mxu0 0.0
    %357 = vmatprep.subr.mxu0 0.0
    %358 = vmatpush1.xpose.msra.mxu0 0.0
    %359 = vmatprep.subr.mxu0 0.0
    %360 = vmatpush1.xpose.msra.mxu0 0.0
    %361 = vmatprep.mubr.f32.mxu0 0.0
    %362 = vmatmul.mubr.f32.gmra.mrb[0].mxu0 %v250
    %v363 = vpop.f32.mrb[0].mxu0
    %v364 = vadd.f32 0.0, %v363
    %v365 = vpop.f32.mrb[0].mxu0
    %366 = vmatprep.mubr.f32.mxu0 0.0
    %367 = vmatmul.mubr.f32.gmra.mrb[0].mxu0 %v253
    %v368 = vpop.f32.mrb[0].mxu0
    %v369 = vadd.f32 0.0, %v368
    %v370 = vpop.f32.mrb[0].mxu0
    %371 = vmatprep.mubr.f32.mxu0 0.0
    %372 = vmatmul.mubr.f32.gmra.mrb[0].mxu0 %v256
    %v373 = vpop.f32.mrb[0].mxu0
    %v374 = vadd.f32 0.0, %v373
    %v375 = vpop.f32.mrb[0].mxu0
    %376 = vmatprep.mubr.f32.mxu0 0.0
    %377 = vmatmul.mubr.f32.gmra.mrb[0].mxu0 %v259
    %v378 = vpop.f32.mrb[0].mxu0
    %v379 = vadd.f32 0.0, %v378
    %v380 = vpop.f32.mrb[0].mxu0
    %381 = vmatprep.mubr.f32.mxu0 0.0
    %382 = vmatmul.mubr.f32.gmra.mrb[0].mxu0 %v262
    %v383 = vpop.f32.mrb[0].mxu0
    %v384 = vadd.f32 0.0, %v383
    %v385 = vpop.f32.mrb[0].mxu0
    %386 = vmatprep.mubr.f32.mxu0 0.0
    %387 = vmatmul.mubr.f32.gmra.mrb[0].mxu0 %v265
    %v388 = vpop.f32.mrb[0].mxu0
    %v389 = vadd.f32 0.0, %v388
    %v390 = vpop.f32.mrb[0].mxu0
    %391 = vmatprep.mubr.f32.mxu0 0.0
    %392 = vmatmul.mubr.f32.gmra.mrb[0].mxu0 %v268
    %v393 = vpop.f32.mrb[0].mxu0
    %v394 = vadd.f32 0.0, %v393
    %v395 = vpop.f32.mrb[0].mxu0
    %396 = vmatprep.mubr.f32.mxu0 0.0
    %397 = vmatmul.mubr.f32.gmra.mrb[0].mxu0 %v271
    %v398 = vpop.f32.mrb[0].mxu0
    %v399 = vadd.f32 0.0, %v398
    %v400 = vpop.f32.mrb[0].mxu0
    %401 = vdwg.mxu0
    %v403 = vsel %vm248, %v64, 0
    %v406 = vsel %vm248, %v65, 0
    %v409 = vsel %vm248, %v66, 0
    %v412 = vsel %vm248, %v67, 0
    %v415 = vsel %vm248, %v68, 0
    %v418 = vsel %vm248, %v69, 0
    %v421 = vsel %vm248, %v70, 0
    %v424 = vsel %vm248, %v71, 0
    %v427 = vsel %vm248, %v128, 0
    %v430 = vsel %vm248, %v129, 0
    %v433 = vsel %vm248, %v130, 0
    %v436 = vsel %vm248, %v131, 0
    %v439 = vsel %vm248, %v132, 0
    %v442 = vsel %vm248, %v133, 0
    %v445 = vsel %vm248, %v134, 0
    %v448 = vsel %vm248, %v135, 0
    %450 = vmatprep.subr.mxu0 0.0
    %451 = vmatpush1.xpose.msra.mxu0 %v427
    %452 = vmatprep.subr.mxu0 0.0
    %453 = vmatpush1.xpose.msra.mxu0 %v430
    %454 = vmatprep.subr.mxu0 0.0
    %455 = vmatpush1.xpose.msra.mxu0 %v433
    %456 = vmatprep.subr.mxu0 0.0
    %457 = vmatpush1.xpose.msra.mxu0 %v436
    %458 = vmatprep.subr.mxu0 0.0
    %459 = vmatpush1.xpose.msra.mxu0 %v439
    %460 = vmatprep.subr.mxu0 0.0
    %461 = vmatpush1.xpose.msra.mxu0 %v442
    %462 = vmatprep.subr.mxu0 0.0
    %463 = vmatpush1.xpose.msra.mxu0 %v445
    %464 = vmatprep.subr.mxu0 0.0
    %465 = vmatpush1.xpose.msra.mxu0 %v448
    %466 = vmatprep.subr.mxu0 0.0
    %467 = vmatpush1.xpose.msra.mxu0 0.0
    %468 = vmatprep.subr.mxu0 0.0
    %469 = vmatpush1.xpose.msra.mxu0 0.0
    %470 = vmatprep.subr.mxu0 0.0
    %471 = vmatpush1.xpose.msra.mxu0 0.0
    %472 = vmatprep.subr.mxu0 0.0
    %473 = vmatpush1.xpose.msra.mxu0 0.0
    %474 = vmatprep.subr.mxu0 0.0
    %475 = vmatpush1.xpose.msra.mxu0 0.0
    %476 = vmatprep.subr.mxu0 0.0
    %477 = vmatpush1.xpose.msra.mxu0 0.0
    %478 = vmatprep.subr.mxu0 0.0
    %479 = vmatpush1.xpose.msra.mxu0 0.0
    %480 = vmatprep.subr.mxu0 0.0
    %481 = vmatpush1.xpose.msra.mxu0 0.0
    %482 = vmatprep.subr.mxu0 0.0
    %483 = vmatpush1.xpose.msra.mxu0 0.0
    %484 = vmatprep.subr.mxu0 0.0
    %485 = vmatpush1.xpose.msra.mxu0 0.0
    %486 = vmatprep.subr.mxu0 0.0
    %487 = vmatpush1.xpose.msra.mxu0 0.0
    %488 = vmatprep.subr.mxu0 0.0
    %489 = vmatpush1.xpose.msra.mxu0 0.0
    %490 = vmatprep.subr.mxu0 0.0
    %491 = vmatpush1.xpose.msra.mxu0 0.0
    %492 = vmatprep.subr.mxu0 0.0
    %493 = vmatpush1.xpose.msra.mxu0 0.0
    %494 = vmatprep.subr.mxu0 0.0
    %495 = vmatpush1.xpose.msra.mxu0 0.0
    %496 = vmatprep.subr.mxu0 0.0
    %497 = vmatpush1.xpose.msra.mxu0 0.0
    %498 = vmatprep.subr.mxu0 0.0
    %499 = vmatpush1.xpose.msra.mxu0 0.0
    %500 = vmatprep.subr.mxu0 0.0
    %501 = vmatpush1.xpose.msra.mxu0 0.0
    %502 = vmatprep.subr.mxu0 0.0
    %503 = vmatpush1.xpose.msra.mxu0 0.0
    %504 = vmatprep.subr.mxu0 0.0
    %505 = vmatpush1.xpose.msra.mxu0 0.0
    %506 = vmatprep.subr.mxu0 0.0
    %507 = vmatpush1.xpose.msra.mxu0 0.0
    %508 = vmatprep.subr.mxu0 0.0
    %509 = vmatpush1.xpose.msra.mxu0 0.0
    %510 = vmatprep.subr.mxu0 0.0
    %511 = vmatpush1.xpose.msra.mxu0 0.0
    %512 = vmatprep.subr.mxu0 0.0
    %513 = vmatpush1.xpose.msra.mxu0 0.0
    %514 = vmatprep.mubr.f32.mxu0 0.0
    %515 = vmatmul.mubr.f32.gmra.mrb[0].mxu0 %v403
    %v516 = vpop.f32.mrb[0].mxu0
    %v517 = vadd.f32 0.0, %v516
    %v518 = vpop.f32.mrb[0].mxu0
    %519 = vmatprep.mubr.f32.mxu0 0.0
    %520 = vmatmul.mubr.f32.gmra.mrb[0].mxu0 %v406
    %v521 = vpop.f32.mrb[0].mxu0
    %v522 = vadd.f32 0.0, %v521
    %v523 = vpop.f32.mrb[0].mxu0
    %524 = vmatprep.mubr.f32.mxu0 0.0
    %525 = vmatmul.mubr.f32.gmra.mrb[0].mxu0 %v409
    %v526 = vpop.f32.mrb[0].mxu0
    %v527 = vadd.f32 0.0, %v526
    %v528 = vpop.f32.mrb[0].mxu0
    %529 = vmatprep.mubr.f32.mxu0 0.0
    %530 = vmatmul.mubr.f32.gmra.mrb[0].mxu0 %v412
    %v531 = vpop.f32.mrb[0].mxu0
    %v532 = vadd.f32 0.0, %v531
    %v533 = vpop.f32.mrb[0].mxu0
    %534 = vmatprep.mubr.f32.mxu0 0.0
    %535 = vmatmul.mubr.f32.gmra.mrb[0].mxu0 %v415
    %v536 = vpop.f32.mrb[0].mxu0
    %v537 = vadd.f32 0.0, %v536
    %v538 = vpop.f32.mrb[0].mxu0
    %539 = vmatprep.mubr.f32.mxu0 0.0
    %540 = vmatmul.mubr.f32.gmra.mrb[0].mxu0 %v418
    %v541 = vpop.f32.mrb[0].mxu0
    %v542 = vadd.f32 0.0, %v541
    %v543 = vpop.f32.mrb[0].mxu0
    %544 = vmatprep.mubr.f32.mxu0 0.0
    %545 = vmatmul.mubr.f32.gmra.mrb[0].mxu0 %v421
    %v546 = vpop.f32.mrb[0].mxu0
    %v547 = vadd.f32 0.0, %v546
    %v548 = vpop.f32.mrb[0].mxu0
    %549 = vmatprep.mubr.f32.mxu0 0.0
    %550 = vmatmul.mubr.f32.gmra.mrb[0].mxu0 %v424
    %v551 = vpop.f32.mrb[0].mxu0
    %v552 = vadd.f32 0.0, %v551
    %v553 = vpop.f32.mrb[0].mxu0
    %554 = vdwg.mxu0
    %v556 = vsel %vm248, %v72, 0
    %v559 = vsel %vm248, %v73, 0
    %v562 = vsel %vm248, %v74, 0
    %v565 = vsel %vm248, %v75, 0
    %v568 = vsel %vm248, %v76, 0
    %v571 = vsel %vm248, %v77, 0
    %v574 = vsel %vm248, %v78, 0
    %v577 = vsel %vm248, %v79, 0
    %v580 = vsel %vm248, %v136, 0
    %v583 = vsel %vm248, %v137, 0
    %v586 = vsel %vm248, %v138, 0
    %v589 = vsel %vm248, %v139, 0
    %v592 = vsel %vm248, %v140, 0
    %v595 = vsel %vm248, %v141, 0
    %v598 = vsel %vm248, %v142, 0
    %v601 = vsel %vm248, %v143, 0
    %603 = vmatprep.subr.mxu0 0.0
    %604 = vmatpush1.xpose.msra.mxu0 %v580
    %605 = vmatprep.subr.mxu0 0.0
    %606 = vmatpush1.xpose.msra.mxu0 %v583
    %607 = vmatprep.subr.mxu0 0.0
    %608 = vmatpush1.xpose.msra.mxu0 %v586
    %609 = vmatprep.subr.mxu0 0.0
    %610 = vmatpush1.xpose.msra.mxu0 %v589
    %611 = vmatprep.subr.mxu0 0.0
    %612 = vmatpush1.xpose.msra.mxu0 %v592
    %613 = vmatprep.subr.mxu0 0.0
    %614 = vmatpush1.xpose.msra.mxu0 %v595
    %615 = vmatprep.subr.mxu0 0.0
    %616 = vmatpush1.xpose.msra.mxu0 %v598
    %617 = vmatprep.subr.mxu0 0.0
    %618 = vmatpush1.xpose.msra.mxu0 %v601
    %619 = vmatprep.subr.mxu0 0.0
    %620 = vmatpush1.xpose.msra.mxu0 0.0
    %621 = vmatprep.subr.mxu0 0.0
    %622 = vmatpush1.xpose.msra.mxu0 0.0
    %623 = vmatprep.subr.mxu0 0.0
    %624 = vmatpush1.xpose.msra.mxu0 0.0
    %625 = vmatprep.subr.mxu0 0.0
    %626 = vmatpush1.xpose.msra.mxu0 0.0
    %627 = vmatprep.subr.mxu0 0.0
    %628 = vmatpush1.xpose.msra.mxu0 0.0
    %629 = vmatprep.subr.mxu0 0.0
    %630 = vmatpush1.xpose.msra.mxu0 0.0
    %631 = vmatprep.subr.mxu0 0.0
    %632 = vmatpush1.xpose.msra.mxu0 0.0
    %633 = vmatprep.subr.mxu0 0.0
    %634 = vmatpush1.xpose.msra.mxu0 0.0
    %635 = vmatprep.subr.mxu0 0.0
    %636 = vmatpush1.xpose.msra.mxu0 0.0
    %637 = vmatprep.subr.mxu0 0.0
    %638 = vmatpush1.xpose.msra.mxu0 0.0
    %639 = vmatprep.subr.mxu0 0.0
    %640 = vmatpush1.xpose.msra.mxu0 0.0
    %641 = vmatprep.subr.mxu0 0.0
    %642 = vmatpush1.xpose.msra.mxu0 0.0
    %643 = vmatprep.subr.mxu0 0.0
    %644 = vmatpush1.xpose.msra.mxu0 0.0
    %645 = vmatprep.subr.mxu0 0.0
    %646 = vmatpush1.xpose.msra.mxu0 0.0
    %647 = vmatprep.subr.mxu0 0.0
    %648 = vmatpush1.xpose.msra.mxu0 0.0
    %649 = vmatprep.subr.mxu0 0.0
    %650 = vmatpush1.xpose.msra.mxu0 0.0
    %651 = vmatprep.subr.mxu0 0.0
    %652 = vmatpush1.xpose.msra.mxu0 0.0
    %653 = vmatprep.subr.mxu0 0.0
    %654 = vmatpush1.xpose.msra.mxu0 0.0
    %655 = vmatprep.subr.mxu0 0.0
    %656 = vmatpush1.xpose.msra.mxu0 0.0
    %657 = vmatprep.subr.mxu0 0.0
    %658 = vmatpush1.xpose.msra.mxu0 0.0
    %659 = vmatprep.subr.mxu0 0.0
    %660 = vmatpush1.xpose.msra.mxu0 0.0
    %661 = vmatprep.subr.mxu0 0.0
    %662 = vmatpush1.xpose.msra.mxu0 0.0
    %663 = vmatprep.subr.mxu0 0.0
    %664 = vmatpush1.xpose.msra.mxu0 0.0
    %665 = vmatprep.subr.mxu0 0.0
    %666 = vmatpush1.xpose.msra.mxu0 0.0
    %667 = vmatprep.mubr.f32.mxu0 0.0
    %668 = vmatmul.mubr.f32.gmra.mrb[0].mxu0 %v556
    %v669 = vpop.f32.mrb[0].mxu0
    %v670 = vadd.f32 0.0, %v669
    %v671 = vpop.f32.mrb[0].mxu0
    %672 = vmatprep.mubr.f32.mxu0 0.0
    %673 = vmatmul.mubr.f32.gmra.mrb[0].mxu0 %v559
    %v674 = vpop.f32.mrb[0].mxu0
    %v675 = vadd.f32 0.0, %v674
    %v676 = vpop.f32.mrb[0].mxu0
    %677 = vmatprep.mubr.f32.mxu0 0.0
    %678 = vmatmul.mubr.f32.gmra.mrb[0].mxu0 %v562
    %v679 = vpop.f32.mrb[0].mxu0
    %v680 = vadd.f32 0.0, %v679
    %v681 = vpop.f32.mrb[0].mxu0
    %682 = vmatprep.mubr.f32.mxu0 0.0
    %683 = vmatmul.mubr.f32.gmra.mrb[0].mxu0 %v565
    %v684 = vpop.f32.mrb[0].mxu0
    %v685 = vadd.f32 0.0, %v684
    %v686 = vpop.f32.mrb[0].mxu0
    %687 = vmatprep.mubr.f32.mxu0 0.0
    %688 = vmatmul.mubr.f32.gmra.mrb[0].mxu0 %v568
    %v689 = vpop.f32.mrb[0].mxu0
    %v690 = vadd.f32 0.0, %v689
    %v691 = vpop.f32.mrb[0].mxu0
    %692 = vmatprep.mubr.f32.mxu0 0.0
    %693 = vmatmul.mubr.f32.gmra.mrb[0].mxu0 %v571
    %v694 = vpop.f32.mrb[0].mxu0
    %v695 = vadd.f32 0.0, %v694
    %v696 = vpop.f32.mrb[0].mxu0
    %697 = vmatprep.mubr.f32.mxu0 0.0
    %698 = vmatmul.mubr.f32.gmra.mrb[0].mxu0 %v574
    %v699 = vpop.f32.mrb[0].mxu0
    %v700 = vadd.f32 0.0, %v699
    %v701 = vpop.f32.mrb[0].mxu0
    %702 = vmatprep.mubr.f32.mxu0 0.0
    %703 = vmatmul.mubr.f32.gmra.mrb[0].mxu0 %v577
    %v704 = vpop.f32.mrb[0].mxu0
    %v705 = vadd.f32 0.0, %v704
    %v706 = vpop.f32.mrb[0].mxu0
    %707 = vdwg.mxu0
    %v709 = vsel %vm248, %v80, 0
    %v712 = vsel %vm248, %v81, 0
    %v715 = vsel %vm248, %v82, 0
    %v718 = vsel %vm248, %v83, 0
    %v721 = vsel %vm248, %v84, 0
    %v724 = vsel %vm248, %v85, 0
    %v727 = vsel %vm248, %v86, 0
    %v730 = vsel %vm248, %v87, 0
    %v733 = vsel %vm248, %v144, 0
    %v736 = vsel %vm248, %v145, 0
    %v739 = vsel %vm248, %v146, 0
    %v742 = vsel %vm248, %v147, 0
    %v745 = vsel %vm248, %v148, 0
    %v748 = vsel %vm248, %v149, 0
    %v751 = vsel %vm248, %v150, 0
    %v754 = vsel %vm248, %v151, 0
    %756 = vmatprep.subr.mxu0 0.0
    %757 = vmatpush1.xpose.msra.mxu0 %v733
    %758 = vmatprep.subr.mxu0 0.0
    %759 = vmatpush1.xpose.msra.mxu0 %v736
    %760 = vmatprep.subr.mxu0 0.0
    %761 = vmatpush1.xpose.msra.mxu0 %v739
    %762 = vmatprep.subr.mxu0 0.0
    %763 = vmatpush1.xpose.msra.mxu0 %v742
    %764 = vmatprep.subr.mxu0 0.0
    %765 = vmatpush1.xpose.msra.mxu0 %v745
    %766 = vmatprep.subr.mxu0 0.0
    %767 = vmatpush1.xpose.msra.mxu0 %v748
    %768 = vmatprep.subr.mxu0 0.0
    %769 = vmatpush1.xpose.msra.mxu0 %v751
    %770 = vmatprep.subr.mxu0 0.0
    %771 = vmatpush1.xpose.msra.mxu0 %v754
    %772 = vmatprep.subr.mxu0 0.0
    %773 = vmatpush1.xpose.msra.mxu0 0.0
    %774 = vmatprep.subr.mxu0 0.0
    %775 = vmatpush1.xpose.msra.mxu0 0.0
    %776 = vmatprep.subr.mxu0 0.0
    %777 = vmatpush1.xpose.msra.mxu0 0.0
    %778 = vmatprep.subr.mxu0 0.0
    %779 = vmatpush1.xpose.msra.mxu0 0.0
    %780 = vmatprep.subr.mxu0 0.0
    %781 = vmatpush1.xpose.msra.mxu0 0.0
    %782 = vmatprep.subr.mxu0 0.0
    %783 = vmatpush1.xpose.msra.mxu0 0.0
    %784 = vmatprep.subr.mxu0 0.0
    %785 = vmatpush1.xpose.msra.mxu0 0.0
    %786 = vmatprep.subr.mxu0 0.0
    %787 = vmatpush1.xpose.msra.mxu0 0.0
    %788 = vmatprep.subr.mxu0 0.0
    %789 = vmatpush1.xpose.msra.mxu0 0.0
    %790 = vmatprep.subr.mxu0 0.0
    %791 = vmatpush1.xpose.msra.mxu0 0.0
    %792 = vmatprep.subr.mxu0 0.0
    %793 = vmatpush1.xpose.msra.mxu0 0.0
    %794 = vmatprep.subr.mxu0 0.0
    %795 = vmatpush1.xpose.msra.mxu0 0.0
    %796 = vmatprep.subr.mxu0 0.0
    %797 = vmatpush1.xpose.msra.mxu0 0.0
    %798 = vmatprep.subr.mxu0 0.0
    %799 = vmatpush1.xpose.msra.mxu0 0.0
    %800 = vmatprep.subr.mxu0 0.0
    %801 = vmatpush1.xpose.msra.mxu0 0.0
    %802 = vmatprep.subr.mxu0 0.0
    %803 = vmatpush1.xpose.msra.mxu0 0.0
    %804 = vmatprep.subr.mxu0 0.0
    %805 = vmatpush1.xpose.msra.mxu0 0.0
    %806 = vmatprep.subr.mxu0 0.0
    %807 = vmatpush1.xpose.msra.mxu0 0.0
    %808 = vmatprep.subr.mxu0 0.0
    %809 = vmatpush1.xpose.msra.mxu0 0.0
    %810 = vmatprep.subr.mxu0 0.0
    %811 = vmatpush1.xpose.msra.mxu0 0.0
    %812 = vmatprep.subr.mxu0 0.0
    %813 = vmatpush1.xpose.msra.mxu0 0.0
    %814 = vmatprep.subr.mxu0 0.0
    %815 = vmatpush1.xpose.msra.mxu0 0.0
    %816 = vmatprep.subr.mxu0 0.0
    %817 = vmatpush1.xpose.msra.mxu0 0.0
    %818 = vmatprep.subr.mxu0 0.0
    %819 = vmatpush1.xpose.msra.mxu0 0.0
    %820 = vmatprep.mubr.f32.mxu0 0.0
    %821 = vmatmul.mubr.f32.gmra.mrb[0].mxu0 %v709
    %v822 = vpop.f32.mrb[0].mxu0
    %v823 = vadd.f32 0.0, %v822
    %v824 = vpop.f32.mrb[0].mxu0
    %825 = vmatprep.mubr.f32.mxu0 0.0
    %826 = vmatmul.mubr.f32.gmra.mrb[0].mxu0 %v712
    %v827 = vpop.f32.mrb[0].mxu0
    %v828 = vadd.f32 0.0, %v827
    %v829 = vpop.f32.mrb[0].mxu0
    %830 = vmatprep.mubr.f32.mxu0 0.0
    %831 = vmatmul.mubr.f32.gmra.mrb[0].mxu0 %v715
    %v832 = vpop.f32.mrb[0].mxu0
    %v833 = vadd.f32 0.0, %v832
    %v834 = vpop.f32.mrb[0].mxu0
    %835 = vmatprep.mubr.f32.mxu0 0.0
    %836 = vmatmul.mubr.f32.gmra.mrb[0].mxu0 %v718
    %v837 = vpop.f32.mrb[0].mxu0
    %v838 = vadd.f32 0.0, %v837
    %v839 = vpop.f32.mrb[0].mxu0
    %840 = vmatprep.mubr.f32.mxu0 0.0
    %841 = vmatmul.mubr.f32.gmra.mrb[0].mxu0 %v721
    %v842 = vpop.f32.mrb[0].mxu0
    %v843 = vadd.f32 0.0, %v842
    %v844 = vpop.f32.mrb[0].mxu0
    %845 = vmatprep.mubr.f32.mxu0 0.0
    %846 = vmatmul.mubr.f32.gmra.mrb[0].mxu0 %v724
    %v847 = vpop.f32.mrb[0].mxu0
    %v848 = vadd.f32 0.0, %v847
    %v849 = vpop.f32.mrb[0].mxu0
    %850 = vmatprep.mubr.f32.mxu0 0.0
    %851 = vmatmul.mubr.f32.gmra.mrb[0].mxu0 %v727
    %v852 = vpop.f32.mrb[0].mxu0
    %v853 = vadd.f32 0.0, %v852
    %v854 = vpop.f32.mrb[0].mxu0
    %855 = vmatprep.mubr.f32.mxu0 0.0
    %856 = vmatmul.mubr.f32.gmra.mrb[0].mxu0 %v730
    %v857 = vpop.f32.mrb[0].mxu0
    %v858 = vadd.f32 0.0, %v857
    %v859 = vpop.f32.mrb[0].mxu0
    %860 = vdwg.mxu0
    %v862 = vsel %vm248, %v88, 0
    %v865 = vsel %vm248, %v89, 0
    %v868 = vsel %vm248, %v90, 0
    %v871 = vsel %vm248, %v91, 0
    %v874 = vsel %vm248, %v92, 0
    %v877 = vsel %vm248, %v93, 0
    %v880 = vsel %vm248, %v94, 0
    %v883 = vsel %vm248, %v95, 0
    %v886 = vsel %vm248, %v152, 0
    %v889 = vsel %vm248, %v153, 0
    %v892 = vsel %vm248, %v154, 0
    %v895 = vsel %vm248, %v155, 0
    %v898 = vsel %vm248, %v156, 0
    %v901 = vsel %vm248, %v157, 0
    %v904 = vsel %vm248, %v158, 0
    %v907 = vsel %vm248, %v159, 0
    %909 = vmatprep.subr.mxu0 0.0
    %910 = vmatpush1.xpose.msra.mxu0 %v886
    %911 = vmatprep.subr.mxu0 0.0
    %912 = vmatpush1.xpose.msra.mxu0 %v889
    %913 = vmatprep.subr.mxu0 0.0
    %914 = vmatpush1.xpose.msra.mxu0 %v892
    %915 = vmatprep.subr.mxu0 0.0
    %916 = vmatpush1.xpose.msra.mxu0 %v895
    %917 = vmatprep.subr.mxu0 0.0
    %918 = vmatpush1.xpose.msra.mxu0 %v898
    %919 = vmatprep.subr.mxu0 0.0
    %920 = vmatpush1.xpose.msra.mxu0 %v901
    %921 = vmatprep.subr.mxu0 0.0
    %922 = vmatpush1.xpose.msra.mxu0 %v904
    %923 = vmatprep.subr.mxu0 0.0
    %924 = vmatpush1.xpose.msra.mxu0 %v907
    %925 = vmatprep.subr.mxu0 0.0
    %926 = vmatpush1.xpose.msra.mxu0 0.0
    %927 = vmatprep.subr.mxu0 0.0
    %928 = vmatpush1.xpose.msra.mxu0 0.0
    %929 = vmatprep.subr.mxu0 0.0
    %930 = vmatpush1.xpose.msra.mxu0 0.0
    %931 = vmatprep.subr.mxu0 0.0
    %932 = vmatpush1.xpose.msra.mxu0 0.0
    %933 = vmatprep.subr.mxu0 0.0
    %934 = vmatpush1.xpose.msra.mxu0 0.0
    %935 = vmatprep.subr.mxu0 0.0
    %936 = vmatpush1.xpose.msra.mxu0 0.0
    %937 = vmatprep.subr.mxu0 0.0
    %938 = vmatpush1.xpose.msra.mxu0 0.0
    %939 = vmatprep.subr.mxu0 0.0
    %940 = vmatpush1.xpose.msra.mxu0 0.0
    %941 = vmatprep.subr.mxu0 0.0
    %942 = vmatpush1.xpose.msra.mxu0 0.0
    %943 = vmatprep.subr.mxu0 0.0
    %944 = vmatpush1.xpose.msra.mxu0 0.0
    %945 = vmatprep.subr.mxu0 0.0
    %946 = vmatpush1.xpose.msra.mxu0 0.0
    %947 = vmatprep.subr.mxu0 0.0
    %948 = vmatpush1.xpose.msra.mxu0 0.0
    %949 = vmatprep.subr.mxu0 0.0
    %950 = vmatpush1.xpose.msra.mxu0 0.0
    %951 = vmatprep.subr.mxu0 0.0
    %952 = vmatpush1.xpose.msra.mxu0 0.0
    %953 = vmatprep.subr.mxu0 0.0
    %954 = vmatpush1.xpose.msra.mxu0 0.0
    %955 = vmatprep.subr.mxu0 0.0
    %956 = vmatpush1.xpose.msra.mxu0 0.0
    %957 = vmatprep.subr.mxu0 0.0
    %958 = vmatpush1.xpose.msra.mxu0 0.0
    %959 = vmatprep.subr.mxu0 0.0
    %960 = vmatpush1.xpose.msra.mxu0 0.0
    %961 = vmatprep.subr.mxu0 0.0
    %962 = vmatpush1.xpose.msra.mxu0 0.0
    %963 = vmatprep.subr.mxu0 0.0
    %964 = vmatpush1.xpose.msra.mxu0 0.0
    %965 = vmatprep.subr.mxu0 0.0
    %966 = vmatpush1.xpose.msra.mxu0 0.0
    %967 = vmatprep.subr.mxu0 0.0
    %968 = vmatpush1.xpose.msra.mxu0 0.0
    %969 = vmatprep.subr.mxu0 0.0
    %970 = vmatpush1.xpose.msra.mxu0 0.0
    %971 = vmatprep.subr.mxu0 0.0
    %972 = vmatpush1.xpose.msra.mxu0 0.0
    %973 = vmatprep.mubr.f32.mxu0 0.0
    %974 = vmatmul.mubr.f32.gmra.mrb[0].mxu0 %v862
    %v975 = vpop.f32.mrb[0].mxu0
    %v976 = vadd.f32 0.0, %v975
    %v977 = vpop.f32.mrb[0].mxu0
    %978 = vmatprep.mubr.f32.mxu0 0.0
    %979 = vmatmul.mubr.f32.gmra.mrb[0].mxu0 %v865
    %v980 = vpop.f32.mrb[0].mxu0
    %v981 = vadd.f32 0.0, %v980
    %v982 = vpop.f32.mrb[0].mxu0
    %983 = vmatprep.mubr.f32.mxu0 0.0
    %984 = vmatmul.mubr.f32.gmra.mrb[0].mxu0 %v868
    %v985 = vpop.f32.mrb[0].mxu0
    %v986 = vadd.f32 0.0, %v985
    %v987 = vpop.f32.mrb[0].mxu0
    %988 = vmatprep.mubr.f32.mxu0 0.0
    %989 = vmatmul.mubr.f32.gmra.mrb[0].mxu0 %v871
    %v990 = vpop.f32.mrb[0].mxu0
    %v991 = vadd.f32 0.0, %v990
    %v992 = vpop.f32.mrb[0].mxu0
    %993 = vmatprep.mubr.f32.mxu0 0.0
    %994 = vmatmul.mubr.f32.gmra.mrb[0].mxu0 %v874
    %v995 = vpop.f32.mrb[0].mxu0
    %v996 = vadd.f32 0.0, %v995
    %v997 = vpop.f32.mrb[0].mxu0
    %998 = vmatprep.mubr.f32.mxu0 0.0
    %999 = vmatmul.mubr.f32.gmra.mrb[0].mxu0 %v877
    %v1000 = vpop.f32.mrb[0].mxu0
    %v1001 = vadd.f32 0.0, %v1000
    %v1002 = vpop.f32.mrb[0].mxu0
    %1003 = vmatprep.mubr.f32.mxu0 0.0
    %1004 = vmatmul.mubr.f32.gmra.mrb[0].mxu0 %v880
    %v1005 = vpop.f32.mrb[0].mxu0
    %v1006 = vadd.f32 0.0, %v1005
    %v1007 = vpop.f32.mrb[0].mxu0
    %1008 = vmatprep.mubr.f32.mxu0 0.0
    %1009 = vmatmul.mubr.f32.gmra.mrb[0].mxu0 %v883
    %v1010 = vpop.f32.mrb[0].mxu0
    %v1011 = vadd.f32 0.0, %v1010
    %v1012 = vpop.f32.mrb[0].mxu0
    %1013 = vdwg.mxu0
    %v1015 = vsel %vm248, %v96, 0
    %v1018 = vsel %vm248, %v97, 0
    %v1021 = vsel %vm248, %v98, 0
    %v1024 = vsel %vm248, %v99, 0
    %v1027 = vsel %vm248, %v100, 0
    %v1030 = vsel %vm248, %v101, 0
    %v1033 = vsel %vm248, %v102, 0
    %v1036 = vsel %vm248, %v103, 0
    %v1039 = vsel %vm248, %v160, 0
    %v1042 = vsel %vm248, %v161, 0
    %v1045 = vsel %vm248, %v162, 0
    %v1048 = vsel %vm248, %v163, 0
    %v1051 = vsel %vm248, %v164, 0
    %v1054 = vsel %vm248, %v165, 0
    %v1057 = vsel %vm248, %v166, 0
    %v1060 = vsel %vm248, %v167, 0
    %1062 = vmatprep.subr.mxu0 0.0
    %1063 = vmatpush1.xpose.msra.mxu0 %v1039
    %1064 = vmatprep.subr.mxu0 0.0
    %1065 = vmatpush1.xpose.msra.mxu0 %v1042
    %1066 = vmatprep.subr.mxu0 0.0
    %1067 = vmatpush1.xpose.msra.mxu0 %v1045
    %1068 = vmatprep.subr.mxu0 0.0
    %1069 = vmatpush1.xpose.msra.mxu0 %v1048
    %1070 = vmatprep.subr.mxu0 0.0
    %1071 = vmatpush1.xpose.msra.mxu0 %v1051
    %1072 = vmatprep.subr.mxu0 0.0
    %1073 = vmatpush1.xpose.msra.mxu0 %v1054
    %1074 = vmatprep.subr.mxu0 0.0
    %1075 = vmatpush1.xpose.msra.mxu0 %v1057
    %1076 = vmatprep.subr.mxu0 0.0
    %1077 = vmatpush1.xpose.msra.mxu0 %v1060
    %1078 = vmatprep.subr.mxu0 0.0
    %1079 = vmatpush1.xpose.msra.mxu0 0.0
    %1080 = vmatprep.subr.mxu0 0.0
    %1081 = vmatpush1.xpose.msra.mxu0 0.0
    %1082 = vmatprep.subr.mxu0 0.0
    %1083 = vmatpush1.xpose.msra.mxu0 0.0
    %1084 = vmatprep.subr.mxu0 0.0
    %1085 = vmatpush1.xpose.msra.mxu0 0.0
    %1086 = vmatprep.subr.mxu0 0.0
    %1087 = vmatpush1.xpose.msra.mxu0 0.0
    %1088 = vmatprep.subr.mxu0 0.0
    %1089 = vmatpush1.xpose.msra.mxu0 0.0
    %1090 = vmatprep.subr.mxu0 0.0
    %1091 = vmatpush1.xpose.msra.mxu0 0.0
    %1092 = vmatprep.subr.mxu0 0.0
    %1093 = vmatpush1.xpose.msra.mxu0 0.0
    %1094 = vmatprep.subr.mxu0 0.0
    %1095 = vmatpush1.xpose.msra.mxu0 0.0
    %1096 = vmatprep.subr.mxu0 0.0
    %1097 = vmatpush1.xpose.msra.mxu0 0.0
    %1098 = vmatprep.subr.mxu0 0.0
    %1099 = vmatpush1.xpose.msra.mxu0 0.0
    %1100 = vmatprep.subr.mxu0 0.0
    %1101 = vmatpush1.xpose.msra.mxu0 0.0
    %1102 = vmatprep.subr.mxu0 0.0
    %1103 = vmatpush1.xpose.msra.mxu0 0.0
    %1104 = vmatprep.subr.mxu0 0.0
    %1105 = vmatpush1.xpose.msra.mxu0 0.0
    %1106 = vmatprep.subr.mxu0 0.0
    %1107 = vmatpush1.xpose.msra.mxu0 0.0
    %1108 = vmatprep.subr.mxu0 0.0
    %1109 = vmatpush1.xpose.msra.mxu0 0.0
    %1110 = vmatprep.subr.mxu0 0.0
    %1111 = vmatpush1.xpose.msra.mxu0 0.0
    %1112 = vmatprep.subr.mxu0 0.0
    %1113 = vmatpush1.xpose.msra.mxu0 0.0
    %1114 = vmatprep.subr.mxu0 0.0
    %1115 = vmatpush1.xpose.msra.mxu0 0.0
    %1116 = vmatprep.subr.mxu0 0.0
    %1117 = vmatpush1.xpose.msra.mxu0 0.0
    %1118 = vmatprep.subr.mxu0 0.0
    %1119 = vmatpush1.xpose.msra.mxu0 0.0
    %1120 = vmatprep.subr.mxu0 0.0
    %1121 = vmatpush1.xpose.msra.mxu0 0.0
    %1122 = vmatprep.subr.mxu0 0.0
    %1123 = vmatpush1.xpose.msra.mxu0 0.0
    %1124 = vmatprep.subr.mxu0 0.0
    %1125 = vmatpush1.xpose.msra.mxu0 0.0
    %1126 = vmatprep.mubr.f32.mxu0 0.0
    %1127 = vmatmul.mubr.f32.gmra.mrb[0].mxu0 %v1015
    %v1128 = vpop.f32.mrb[0].mxu0
    %v1129 = vadd.f32 0.0, %v1128
    %v1130 = vpop.f32.mrb[0].mxu0
    %1131 = vmatprep.mubr.f32.mxu0 0.0
    %1132 = vmatmul.mubr.f32.gmra.mrb[0].mxu0 %v1018
    %v1133 = vpop.f32.mrb[0].mxu0
    %v1134 = vadd.f32 0.0, %v1133
    %v1135 = vpop.f32.mrb[0].mxu0
    %1136 = vmatprep.mubr.f32.mxu0 0.0
    %1137 = vmatmul.mubr.f32.gmra.mrb[0].mxu0 %v1021
    %v1138 = vpop.f32.mrb[0].mxu0
    %v1139 = vadd.f32 0.0, %v1138
    %v1140 = vpop.f32.mrb[0].mxu0
    %1141 = vmatprep.mubr.f32.mxu0 0.0
    %1142 = vmatmul.mubr.f32.gmra.mrb[0].mxu0 %v1024
    %v1143 = vpop.f32.mrb[0].mxu0
    %v1144 = vadd.f32 0.0, %v1143
    %v1145 = vpop.f32.mrb[0].mxu0
    %1146 = vmatprep.mubr.f32.mxu0 0.0
    %1147 = vmatmul.mubr.f32.gmra.mrb[0].mxu0 %v1027
    %v1148 = vpop.f32.mrb[0].mxu0
    %v1149 = vadd.f32 0.0, %v1148
    %v1150 = vpop.f32.mrb[0].mxu0
    %1151 = vmatprep.mubr.f32.mxu0 0.0
    %1152 = vmatmul.mubr.f32.gmra.mrb[0].mxu0 %v1030
    %v1153 = vpop.f32.mrb[0].mxu0
    %v1154 = vadd.f32 0.0, %v1153
    %v1155 = vpop.f32.mrb[0].mxu0
    %1156 = vmatprep.mubr.f32.mxu0 0.0
    %1157 = vmatmul.mubr.f32.gmra.mrb[0].mxu0 %v1033
    %v1158 = vpop.f32.mrb[0].mxu0
    %v1159 = vadd.f32 0.0, %v1158
    %v1160 = vpop.f32.mrb[0].mxu0
    %1161 = vmatprep.mubr.f32.mxu0 0.0
    %1162 = vmatmul.mubr.f32.gmra.mrb[0].mxu0 %v1036
    %v1163 = vpop.f32.mrb[0].mxu0
    %v1164 = vadd.f32 0.0, %v1163
    %v1165 = vpop.f32.mrb[0].mxu0
    %1166 = vdwg.mxu0
    %v1168 = vsel %vm248, %v104, 0
    %v1171 = vsel %vm248, %v105, 0
    %v1174 = vsel %vm248, %v106, 0
    %v1177 = vsel %vm248, %v107, 0
    %v1180 = vsel %vm248, %v108, 0
    %v1183 = vsel %vm248, %v109, 0
    %v1186 = vsel %vm248, %v110, 0
    %v1189 = vsel %vm248, %v111, 0
    %v1192 = vsel %vm248, %v168, 0
    %v1195 = vsel %vm248, %v169, 0
    %v1198 = vsel %vm248, %v170, 0
    %v1201 = vsel %vm248, %v171, 0
    %v1204 = vsel %vm248, %v172, 0
    %v1207 = vsel %vm248, %v173, 0
    %v1210 = vsel %vm248, %v174, 0
    %v1213 = vsel %vm248, %v175, 0
    %1215 = vmatprep.subr.mxu0 0.0
    %1216 = vmatpush1.xpose.msra.mxu0 %v1192
    %1217 = vmatprep.subr.mxu0 0.0
    %1218 = vmatpush1.xpose.msra.mxu0 %v1195
    %1219 = vmatprep.subr.mxu0 0.0
    %1220 = vmatpush1.xpose.msra.mxu0 %v1198
    %1221 = vmatprep.subr.mxu0 0.0
    %1222 = vmatpush1.xpose.msra.mxu0 %v1201
    %1223 = vmatprep.subr.mxu0 0.0
    %1224 = vmatpush1.xpose.msra.mxu0 %v1204
    %1225 = vmatprep.subr.mxu0 0.0
    %1226 = vmatpush1.xpose.msra.mxu0 %v1207
    %1227 = vmatprep.subr.mxu0 0.0
    %1228 = vmatpush1.xpose.msra.mxu0 %v1210
    %1229 = vmatprep.subr.mxu0 0.0
    %1230 = vmatpush1.xpose.msra.mxu0 %v1213
    %1231 = vmatprep.subr.mxu0 0.0
    %1232 = vmatpush1.xpose.msra.mxu0 0.0
    %1233 = vmatprep.subr.mxu0 0.0
    %1234 = vmatpush1.xpose.msra.mxu0 0.0
    %1235 = vmatprep.subr.mxu0 0.0
    %1236 = vmatpush1.xpose.msra.mxu0 0.0
    %1237 = vmatprep.subr.mxu0 0.0
    %1238 = vmatpush1.xpose.msra.mxu0 0.0
    %1239 = vmatprep.subr.mxu0 0.0
    %1240 = vmatpush1.xpose.msra.mxu0 0.0
    %1241 = vmatprep.subr.mxu0 0.0
    %1242 = vmatpush1.xpose.msra.mxu0 0.0
    %1243 = vmatprep.subr.mxu0 0.0
    %1244 = vmatpush1.xpose.msra.mxu0 0.0
    %1245 = vmatprep.subr.mxu0 0.0
    %1246 = vmatpush1.xpose.msra.mxu0 0.0
    %1247 = vmatprep.subr.mxu0 0.0
    %1248 = vmatpush1.xpose.msra.mxu0 0.0
    %1249 = vmatprep.subr.mxu0 0.0
    %1250 = vmatpush1.xpose.msra.mxu0 0.0
    %1251 = vmatprep.subr.mxu0 0.0
    %1252 = vmatpush1.xpose.msra.mxu0 0.0
    %1253 = vmatprep.subr.mxu0 0.0
    %1254 = vmatpush1.xpose.msra.mxu0 0.0
    %1255 = vmatprep.subr.mxu0 0.0
    %1256 = vmatpush1.xpose.msra.mxu0 0.0
    %1257 = vmatprep.subr.mxu0 0.0
    %1258 = vmatpush1.xpose.msra.mxu0 0.0
    %1259 = vmatprep.subr.mxu0 0.0
    %1260 = vmatpush1.xpose.msra.mxu0 0.0
    %1261 = vmatprep.subr.mxu0 0.0
    %1262 = vmatpush1.xpose.msra.mxu0 0.0
    %1263 = vmatprep.subr.mxu0 0.0
    %1264 = vmatpush1.xpose.msra.mxu0 0.0
    %1265 = vmatprep.subr.mxu0 0.0
    %1266 = vmatpush1.xpose.msra.mxu0 0.0
    %1267 = vmatprep.subr.mxu0 0.0
    %1268 = vmatpush1.xpose.msra.mxu0 0.0
    %1269 = vmatprep.subr.mxu0 0.0
    %1270 = vmatpush1.xpose.msra.mxu0 0.0
    %1271 = vmatprep.subr.mxu0 0.0
    %1272 = vmatpush1.xpose.msra.mxu0 0.0
    %1273 = vmatprep.subr.mxu0 0.0
    %1274 = vmatpush1.xpose.msra.mxu0 0.0
    %1275 = vmatprep.subr.mxu0 0.0
    %1276 = vmatpush1.xpose.msra.mxu0 0.0
    %1277 = vmatprep.subr.mxu0 0.0
    %1278 = vmatpush1.xpose.msra.mxu0 0.0
    %1279 = vmatprep.mubr.f32.mxu0 0.0
    %1280 = vmatmul.mubr.f32.gmra.mrb[0].mxu0 %v1168
    %v1281 = vpop.f32.mrb[0].mxu0
    %v1282 = vadd.f32 0.0, %v1281
    %v1283 = vpop.f32.mrb[0].mxu0
    %1284 = vmatprep.mubr.f32.mxu0 0.0
    %1285 = vmatmul.mubr.f32.gmra.mrb[0].mxu0 %v1171
    %v1286 = vpop.f32.mrb[0].mxu0
    %v1287 = vadd.f32 0.0, %v1286
    %v1288 = vpop.f32.mrb[0].mxu0
    %1289 = vmatprep.mubr.f32.mxu0 0.0
    %1290 = vmatmul.mubr.f32.gmra.mrb[0].mxu0 %v1174
    %v1291 = vpop.f32.mrb[0].mxu0
    %v1292 = vadd.f32 0.0, %v1291
    %v1293 = vpop.f32.mrb[0].mxu0
    %1294 = vmatprep.mubr.f32.mxu0 0.0
    %1295 = vmatmul.mubr.f32.gmra.mrb[0].mxu0 %v1177
    %v1296 = vpop.f32.mrb[0].mxu0
    %v1297 = vadd.f32 0.0, %v1296
    %v1298 = vpop.f32.mrb[0].mxu0
    %1299 = vmatprep.mubr.f32.mxu0 0.0
    %1300 = vmatmul.mubr.f32.gmra.mrb[0].mxu0 %v1180
    %v1301 = vpop.f32.mrb[0].mxu0
    %v1302 = vadd.f32 0.0, %v1301
    %v1303 = vpop.f32.mrb[0].mxu0
    %1304 = vmatprep.mubr.f32.mxu0 0.0
    %1305 = vmatmul.mubr.f32.gmra.mrb[0].mxu0 %v1183
    %v1306 = vpop.f32.mrb[0].mxu0
    %v1307 = vadd.f32 0.0, %v1306
    %v1308 = vpop.f32.mrb[0].mxu0
    %1309 = vmatprep.mubr.f32.mxu0 0.0
    %1310 = vmatmul.mubr.f32.gmra.mrb[0].mxu0 %v1186
    %v1311 = vpop.f32.mrb[0].mxu0
    %v1312 = vadd.f32 0.0, %v1311
    %v1313 = vpop.f32.mrb[0].mxu0
    %1314 = vmatprep.mubr.f32.mxu0 0.0
    %1315 = vmatmul.mubr.f32.gmra.mrb[0].mxu0 %v1189
    %v1316 = vpop.f32.mrb[0].mxu0
    %v1317 = vadd.f32 0.0, %v1316
    %v1318 = vpop.f32.mrb[0].mxu0
    %1319 = vdwg.mxu0
    %v1321 = vsel %vm248, %v112, 0
    %v1324 = vsel %vm248, %v113, 0
    %v1327 = vsel %vm248, %v114, 0
    %v1330 = vsel %vm248, %v115, 0
    %v1333 = vsel %vm248, %v116, 0
    %v1336 = vsel %vm248, %v117, 0
    %v1339 = vsel %vm248, %v118, 0
    %v1342 = vsel %vm248, %v119, 0
    %v1345 = vsel %vm248, %v176, 0
    %v1348 = vsel %vm248, %v177, 0
    %v1351 = vsel %vm248, %v178, 0
    %v1354 = vsel %vm248, %v179, 0
    %v1357 = vsel %vm248, %v180, 0
    %v1360 = vsel %vm248, %v181, 0
    %v1363 = vsel %vm248, %v182, 0
    %v1366 = vsel %vm248, %v183, 0
    %1368 = vmatprep.subr.mxu0 0.0
    %1369 = vmatpush1.xpose.msra.mxu0 %v1345
    %1370 = vmatprep.subr.mxu0 0.0
    %1371 = vmatpush1.xpose.msra.mxu0 %v1348
    %1372 = vmatprep.subr.mxu0 0.0
    %1373 = vmatpush1.xpose.msra.mxu0 %v1351
    %1374 = vmatprep.subr.mxu0 0.0
    %1375 = vmatpush1.xpose.msra.mxu0 %v1354
    %1376 = vmatprep.subr.mxu0 0.0
    %1377 = vmatpush1.xpose.msra.mxu0 %v1357
    %1378 = vmatprep.subr.mxu0 0.0
    %1379 = vmatpush1.xpose.msra.mxu0 %v1360
    %1380 = vmatprep.subr.mxu0 0.0
    %1381 = vmatpush1.xpose.msra.mxu0 %v1363
    %1382 = vmatprep.subr.mxu0 0.0
    %1383 = vmatpush1.xpose.msra.mxu0 %v1366
    %1384 = vmatprep.subr.mxu0 0.0
    %1385 = vmatpush1.xpose.msra.mxu0 0.0
    %1386 = vmatprep.subr.mxu0 0.0
    %1387 = vmatpush1.xpose.msra.mxu0 0.0
    %1388 = vmatprep.subr.mxu0 0.0
    %1389 = vmatpush1.xpose.msra.mxu0 0.0
    %1390 = vmatprep.subr.mxu0 0.0
    %1391 = vmatpush1.xpose.msra.mxu0 0.0
    %1392 = vmatprep.subr.mxu0 0.0
    %1393 = vmatpush1.xpose.msra.mxu0 0.0
    %1394 = vmatprep.subr.mxu0 0.0
    %1395 = vmatpush1.xpose.msra.mxu0 0.0
    %1396 = vmatprep.subr.mxu0 0.0
    %1397 = vmatpush1.xpose.msra.mxu0 0.0
    %1398 = vmatprep.subr.mxu0 0.0
    %1399 = vmatpush1.xpose.msra.mxu0 0.0
    %1400 = vmatprep.subr.mxu0 0.0
    %1401 = vmatpush1.xpose.msra.mxu0 0.0
    %1402 = vmatprep.subr.mxu0 0.0
    %1403 = vmatpush1.xpose.msra.mxu0 0.0
    %1404 = vmatprep.subr.mxu0 0.0
    %1405 = vmatpush1.xpose.msra.mxu0 0.0
    %1406 = vmatprep.subr.mxu0 0.0
    %1407 = vmatpush1.xpose.msra.mxu0 0.0
    %1408 = vmatprep.subr.mxu0 0.0
    %1409 = vmatpush1.xpose.msra.mxu0 0.0
    %1410 = vmatprep.subr.mxu0 0.0
    %1411 = vmatpush1.xpose.msra.mxu0 0.0
    %1412 = vmatprep.subr.mxu0 0.0
    %1413 = vmatpush1.xpose.msra.mxu0 0.0
    %1414 = vmatprep.subr.mxu0 0.0
    %1415 = vmatpush1.xpose.msra.mxu0 0.0
    %1416 = vmatprep.subr.mxu0 0.0
    %1417 = vmatpush1.xpose.msra.mxu0 0.0
    %1418 = vmatprep.subr.mxu0 0.0
    %1419 = vmatpush1.xpose.msra.mxu0 0.0
    %1420 = vmatprep.subr.mxu0 0.0
    %1421 = vmatpush1.xpose.msra.mxu0 0.0
    %1422 = vmatprep.subr.mxu0 0.0
    %1423 = vmatpush1.xpose.msra.mxu0 0.0
    %1424 = vmatprep.subr.mxu0 0.0
    %1425 = vmatpush1.xpose.msra.mxu0 0.0
    %1426 = vmatprep.subr.mxu0 0.0
    %1427 = vmatpush1.xpose.msra.mxu0 0.0
    %1428 = vmatprep.subr.mxu0 0.0
    %1429 = vmatpush1.xpose.msra.mxu0 0.0
    %1430 = vmatprep.subr.mxu0 0.0
    %1431 = vmatpush1.xpose.msra.mxu0 0.0
    %1432 = vmatprep.mubr.f32.mxu0 0.0
    %1433 = vmatmul.mubr.f32.gmra.mrb[0].mxu0 %v1321
    %v1434 = vpop.f32.mrb[0].mxu0
    %v1435 = vadd.f32 0.0, %v1434
    %v1436 = vpop.f32.mrb[0].mxu0
    %1437 = vmatprep.mubr.f32.mxu0 0.0
    %1438 = vmatmul.mubr.f32.gmra.mrb[0].mxu0 %v1324
    %v1439 = vpop.f32.mrb[0].mxu0
    %v1440 = vadd.f32 0.0, %v1439
    %v1441 = vpop.f32.mrb[0].mxu0
    %1442 = vmatprep.mubr.f32.mxu0 0.0
    %1443 = vmatmul.mubr.f32.gmra.mrb[0].mxu0 %v1327
    %v1444 = vpop.f32.mrb[0].mxu0
    %v1445 = vadd.f32 0.0, %v1444
    %v1446 = vpop.f32.mrb[0].mxu0
    %1447 = vmatprep.mubr.f32.mxu0 0.0
    %1448 = vmatmul.mubr.f32.gmra.mrb[0].mxu0 %v1330
    %v1449 = vpop.f32.mrb[0].mxu0
    %v1450 = vadd.f32 0.0, %v1449
    %v1451 = vpop.f32.mrb[0].mxu0
    %1452 = vmatprep.mubr.f32.mxu0 0.0
    %1453 = vmatmul.mubr.f32.gmra.mrb[0].mxu0 %v1333
    %v1454 = vpop.f32.mrb[0].mxu0
    %v1455 = vadd.f32 0.0, %v1454
    %v1456 = vpop.f32.mrb[0].mxu0
    %1457 = vmatprep.mubr.f32.mxu0 0.0
    %1458 = vmatmul.mubr.f32.gmra.mrb[0].mxu0 %v1336
    %v1459 = vpop.f32.mrb[0].mxu0
    %v1460 = vadd.f32 0.0, %v1459
    %v1461 = vpop.f32.mrb[0].mxu0
    %1462 = vmatprep.mubr.f32.mxu0 0.0
    %1463 = vmatmul.mubr.f32.gmra.mrb[0].mxu0 %v1339
    %v1464 = vpop.f32.mrb[0].mxu0
    %v1465 = vadd.f32 0.0, %v1464
    %v1466 = vpop.f32.mrb[0].mxu0
    %1467 = vmatprep.mubr.f32.mxu0 0.0
    %1468 = vmatmul.mubr.f32.gmra.mrb[0].mxu0 %v1342
    %v1469 = vpop.f32.mrb[0].mxu0
    %v1470 = vadd.f32 0.0, %v1469
    %v1471 = vpop.f32.mrb[0].mxu0
    %1472 = vdwg.mxu0
    %v1473 = vmul.f32 %v364, 0.125
    %v1474 = vmul.f32 %v369, 0.125
    %v1475 = vmul.f32 %v374, 0.125
    %v1476 = vmul.f32 %v379, 0.125
    %v1477 = vmul.f32 %v384, 0.125
    %v1478 = vmul.f32 %v389, 0.125
    %v1479 = vmul.f32 %v394, 0.125
    %v1480 = vmul.f32 %v399, 0.125
    %v1481 = vmul.f32 %v517, 0.125
    %v1482 = vmul.f32 %v522, 0.125
    %v1483 = vmul.f32 %v527, 0.125
    %v1484 = vmul.f32 %v532, 0.125
    %v1485 = vmul.f32 %v537, 0.125
    %v1486 = vmul.f32 %v542, 0.125
    %v1487 = vmul.f32 %v547, 0.125
    %v1488 = vmul.f32 %v552, 0.125
    %v1489 = vmul.f32 %v670, 0.125
    %v1490 = vmul.f32 %v675, 0.125
    %v1491 = vmul.f32 %v680, 0.125
    %v1492 = vmul.f32 %v685, 0.125
    %v1493 = vmul.f32 %v690, 0.125
    %v1494 = vmul.f32 %v695, 0.125
    %v1495 = vmul.f32 %v700, 0.125
    %v1496 = vmul.f32 %v705, 0.125
    %v1497 = vmul.f32 %v823, 0.125
    %v1498 = vmul.f32 %v828, 0.125
    %v1499 = vmul.f32 %v833, 0.125
    %v1500 = vmul.f32 %v838, 0.125
    %v1501 = vmul.f32 %v843, 0.125
    %v1502 = vmul.f32 %v848, 0.125
    %v1503 = vmul.f32 %v853, 0.125
    %v1504 = vmul.f32 %v858, 0.125
    %v1505 = vmul.f32 %v976, 0.125
    %v1506 = vmul.f32 %v981, 0.125
    %v1507 = vmul.f32 %v986, 0.125
    %v1508 = vmul.f32 %v991, 0.125
    %v1509 = vmul.f32 %v996, 0.125
    %v1510 = vmul.f32 %v1001, 0.125
    %v1511 = vmul.f32 %v1006, 0.125
    %v1512 = vmul.f32 %v1011, 0.125
    %v1513 = vmul.f32 %v1129, 0.125
    %v1514 = vmul.f32 %v1134, 0.125
    %v1515 = vmul.f32 %v1139, 0.125
    %v1516 = vmul.f32 %v1144, 0.125
    %v1517 = vmul.f32 %v1149, 0.125
    %v1518 = vmul.f32 %v1154, 0.125
    %v1519 = vmul.f32 %v1159, 0.125
    %v1520 = vmul.f32 %v1164, 0.125
    %v1521 = vmul.f32 %v1282, 0.125
    %v1522 = vmul.f32 %v1287, 0.125
    %v1523 = vmul.f32 %v1292, 0.125
    %v1524 = vmul.f32 %v1297, 0.125
    %v1525 = vmul.f32 %v1302, 0.125
    %v1526 = vmul.f32 %v1307, 0.125
    %v1527 = vmul.f32 %v1312, 0.125
    %v1528 = vmul.f32 %v1317, 0.125
    %v1529 = vmul.f32 %v1435, 0.125
    %v1530 = vmul.f32 %v1440, 0.125
    %v1531 = vmul.f32 %v1445, 0.125
    %v1532 = vmul.f32 %v1450, 0.125
    %v1533 = vmul.f32 %v1455, 0.125
    %v1534 = vmul.f32 %v1460, 0.125
    %v1535 = vmul.f32 %v1465, 0.125
    %v1536 = vmul.f32 %v1470, 0.125
    %v1537 = vsel %vm248, %v1473, -inf
    %1538 = vmax.xlane.f32.xlu0 %v1537
    %v1539 = vpop.xlane.xlu0 %1538
    %v1540 = vsel %vm248, %v1474, -inf
    %1541 = vmax.xlane.f32.xlu0 %v1540
    %v1542 = vpop.xlane.xlu0 %1541
    %v1543 = vsel %vm248, %v1475, -inf
    %1544 = vmax.xlane.f32.xlu0 %v1543
    %v1545 = vpop.xlane.xlu0 %1544
    %v1546 = vsel %vm248, %v1476, -inf
    %1547 = vmax.xlane.f32.xlu0 %v1546
    %v1548 = vpop.xlane.xlu0 %1547
    %v1549 = vsel %vm248, %v1477, -inf
    %1550 = vmax.xlane.f32.xlu0 %v1549
    %v1551 = vpop.xlane.xlu0 %1550
    %v1552 = vsel %vm248, %v1478, -inf
    %1553 = vmax.xlane.f32.xlu0 %v1552
    %v1554 = vpop.xlane.xlu0 %1553
    %v1555 = vsel %vm248, %v1479, -inf
    %1556 = vmax.xlane.f32.xlu0 %v1555
    %v1557 = vpop.xlane.xlu0 %1556
    %v1558 = vsel %vm248, %v1480, -inf
    %1559 = vmax.xlane.f32.xlu0 %v1558
    %v1560 = vpop.xlane.xlu0 %1559
    %v1561 = vsel %vm248, %v1481, -inf
    %1562 = vmax.xlane.f32.xlu0 %v1561
    %v1563 = vpop.xlane.xlu0 %1562
    %v1564 = vsel %vm248, %v1482, -inf
    %1565 = vmax.xlane.f32.xlu0 %v1564
    %v1566 = vpop.xlane.xlu0 %1565
    %v1567 = vsel %vm248, %v1483, -inf
    %1568 = vmax.xlane.f32.xlu0 %v1567
    %v1569 = vpop.xlane.xlu0 %1568
    %v1570 = vsel %vm248, %v1484, -inf
    %1571 = vmax.xlane.f32.xlu0 %v1570
    %v1572 = vpop.xlane.xlu0 %1571
    %v1573 = vsel %vm248, %v1485, -inf
    %1574 = vmax.xlane.f32.xlu0 %v1573
    %v1575 = vpop.xlane.xlu0 %1574
    %v1576 = vsel %vm248, %v1486, -inf
    %1577 = vmax.xlane.f32.xlu0 %v1576
    %v1578 = vpop.xlane.xlu0 %1577
    %v1579 = vsel %vm248, %v1487, -inf
    %1580 = vmax.xlane.f32.xlu0 %v1579
    %v1581 = vpop.xlane.xlu0 %1580
    %v1582 = vsel %vm248, %v1488, -inf
    %1583 = vmax.xlane.f32.xlu0 %v1582
    %v1584 = vpop.xlane.xlu0 %1583
    %v1585 = vsel %vm248, %v1489, -inf
    %1586 = vmax.xlane.f32.xlu0 %v1585
    %v1587 = vpop.xlane.xlu0 %1586
    %v1588 = vsel %vm248, %v1490, -inf
    %1589 = vmax.xlane.f32.xlu0 %v1588
    %v1590 = vpop.xlane.xlu0 %1589
    %v1591 = vsel %vm248, %v1491, -inf
    %1592 = vmax.xlane.f32.xlu0 %v1591
    %v1593 = vpop.xlane.xlu0 %1592
    %v1594 = vsel %vm248, %v1492, -inf
    %1595 = vmax.xlane.f32.xlu0 %v1594
    %v1596 = vpop.xlane.xlu0 %1595
    %v1597 = vsel %vm248, %v1493, -inf
    %1598 = vmax.xlane.f32.xlu0 %v1597
    %v1599 = vpop.xlane.xlu0 %1598
    %v1600 = vsel %vm248, %v1494, -inf
    %1601 = vmax.xlane.f32.xlu0 %v1600
    %v1602 = vpop.xlane.xlu0 %1601
    %v1603 = vsel %vm248, %v1495, -inf
    %1604 = vmax.xlane.f32.xlu0 %v1603
    %v1605 = vpop.xlane.xlu0 %1604
    %v1606 = vsel %vm248, %v1496, -inf
    %1607 = vmax.xlane.f32.xlu0 %v1606
    %v1608 = vpop.xlane.xlu0 %1607
    %v1609 = vsel %vm248, %v1497, -inf
    %1610 = vmax.xlane.f32.xlu0 %v1609
    %v1611 = vpop.xlane.xlu0 %1610
    %v1612 = vsel %vm248, %v1498, -inf
    %1613 = vmax.xlane.f32.xlu0 %v1612
    %v1614 = vpop.xlane.xlu0 %1613
    %v1615 = vsel %vm248, %v1499, -inf
    %1616 = vmax.xlane.f32.xlu0 %v1615
    %v1617 = vpop.xlane.xlu0 %1616
    %v1618 = vsel %vm248, %v1500, -inf
    %1619 = vmax.xlane.f32.xlu0 %v1618
    %v1620 = vpop.xlane.xlu0 %1619
    %v1621 = vsel %vm248, %v1501, -inf
    %1622 = vmax.xlane.f32.xlu0 %v1621
    %v1623 = vpop.xlane.xlu0 %1622
    %v1624 = vsel %vm248, %v1502, -inf
    %1625 = vmax.xlane.f32.xlu0 %v1624
    %v1626 = vpop.xlane.xlu0 %1625
    %v1627 = vsel %vm248, %v1503, -inf
    %1628 = vmax.xlane.f32.xlu0 %v1627
    %v1629 = vpop.xlane.xlu0 %1628
    %v1630 = vsel %vm248, %v1504, -inf
    %1631 = vmax.xlane.f32.xlu0 %v1630
    %v1632 = vpop.xlane.xlu0 %1631
    %v1633 = vsel %vm248, %v1505, -inf
    %1634 = vmax.xlane.f32.xlu0 %v1633
    %v1635 = vpop.xlane.xlu0 %1634
    %v1636 = vsel %vm248, %v1506, -inf
    %1637 = vmax.xlane.f32.xlu0 %v1636
    %v1638 = vpop.xlane.xlu0 %1637
    %v1639 = vsel %vm248, %v1507, -inf
    %1640 = vmax.xlane.f32.xlu0 %v1639
    %v1641 = vpop.xlane.xlu0 %1640
    %v1642 = vsel %vm248, %v1508, -inf
    %1643 = vmax.xlane.f32.xlu0 %v1642
    %v1644 = vpop.xlane.xlu0 %1643
    %v1645 = vsel %vm248, %v1509, -inf
    %1646 = vmax.xlane.f32.xlu0 %v1645
    %v1647 = vpop.xlane.xlu0 %1646
    %v1648 = vsel %vm248, %v1510, -inf
    %1649 = vmax.xlane.f32.xlu0 %v1648
    %v1650 = vpop.xlane.xlu0 %1649
    %v1651 = vsel %vm248, %v1511, -inf
    %1652 = vmax.xlane.f32.xlu0 %v1651
    %v1653 = vpop.xlane.xlu0 %1652
    %v1654 = vsel %vm248, %v1512, -inf
    %1655 = vmax.xlane.f32.xlu0 %v1654
    %v1656 = vpop.xlane.xlu0 %1655
    %v1657 = vsel %vm248, %v1513, -inf
    %1658 = vmax.xlane.f32.xlu0 %v1657
    %v1659 = vpop.xlane.xlu0 %1658
    %v1660 = vsel %vm248, %v1514, -inf
    %1661 = vmax.xlane.f32.xlu0 %v1660
    %v1662 = vpop.xlane.xlu0 %1661
    %v1663 = vsel %vm248, %v1515, -inf
    %1664 = vmax.xlane.f32.xlu0 %v1663
    %v1665 = vpop.xlane.xlu0 %1664
    %v1666 = vsel %vm248, %v1516, -inf
    %1667 = vmax.xlane.f32.xlu0 %v1666
    %v1668 = vpop.xlane.xlu0 %1667
    %v1669 = vsel %vm248, %v1517, -inf
    %1670 = vmax.xlane.f32.xlu0 %v1669
    %v1671 = vpop.xlane.xlu0 %1670
    %v1672 = vsel %vm248, %v1518, -inf
    %1673 = vmax.xlane.f32.xlu0 %v1672
    %v1674 = vpop.xlane.xlu0 %1673
    %v1675 = vsel %vm248, %v1519, -inf
    %1676 = vmax.xlane.f32.xlu0 %v1675
    %v1677 = vpop.xlane.xlu0 %1676
    %v1678 = vsel %vm248, %v1520, -inf
    %1679 = vmax.xlane.f32.xlu0 %v1678
    %v1680 = vpop.xlane.xlu0 %1679
    %v1681 = vsel %vm248, %v1521, -inf
    %1682 = vmax.xlane.f32.xlu0 %v1681
    %v1683 = vpop.xlane.xlu0 %1682
    %v1684 = vsel %vm248, %v1522, -inf
    %1685 = vmax.xlane.f32.xlu0 %v1684
    %v1686 = vpop.xlane.xlu0 %1685
    %v1687 = vsel %vm248, %v1523, -inf
    %1688 = vmax.xlane.f32.xlu0 %v1687
    %v1689 = vpop.xlane.xlu0 %1688
    %v1690 = vsel %vm248, %v1524, -inf
    %1691 = vmax.xlane.f32.xlu0 %v1690
    %v1692 = vpop.xlane.xlu0 %1691
    %v1693 = vsel %vm248, %v1525, -inf
    %1694 = vmax.xlane.f32.xlu0 %v1693
    %v1695 = vpop.xlane.xlu0 %1694
    %v1696 = vsel %vm248, %v1526, -inf
    %1697 = vmax.xlane.f32.xlu0 %v1696
    %v1698 = vpop.xlane.xlu0 %1697
    %v1699 = vsel %vm248, %v1527, -inf
    %1700 = vmax.xlane.f32.xlu0 %v1699
    %v1701 = vpop.xlane.xlu0 %1700
    %v1702 = vsel %vm248, %v1528, -inf
    %1703 = vmax.xlane.f32.xlu0 %v1702
    %v1704 = vpop.xlane.xlu0 %1703
    %v1705 = vsel %vm248, %v1529, -inf
    %1706 = vmax.xlane.f32.xlu0 %v1705
    %v1707 = vpop.xlane.xlu0 %1706
    %v1708 = vsel %vm248, %v1530, -inf
    %1709 = vmax.xlane.f32.xlu0 %v1708
    %v1710 = vpop.xlane.xlu0 %1709
    %v1711 = vsel %vm248, %v1531, -inf
    %1712 = vmax.xlane.f32.xlu0 %v1711
    %v1713 = vpop.xlane.xlu0 %1712
    %v1714 = vsel %vm248, %v1532, -inf
    %1715 = vmax.xlane.f32.xlu0 %v1714
    %v1716 = vpop.xlane.xlu0 %1715
    %v1717 = vsel %vm248, %v1533, -inf
    %1718 = vmax.xlane.f32.xlu0 %v1717
    %v1719 = vpop.xlane.xlu0 %1718
    %v1720 = vsel %vm248, %v1534, -inf
    %1721 = vmax.xlane.f32.xlu0 %v1720
    %v1722 = vpop.xlane.xlu0 %1721
    %v1723 = vsel %vm248, %v1535, -inf
    %1724 = vmax.xlane.f32.xlu0 %v1723
    %v1725 = vpop.xlane.xlu0 %1724
    %v1726 = vsel %vm248, %v1536, -inf
    %1727 = vmax.xlane.f32.xlu0 %v1726
    %v1728 = vpop.xlane.xlu0 %1727
    %v1729 = vsub.f32 %v1473, %v1539
    %v1730 = vsub.f32 %v1474, %v1542
    %v1731 = vsub.f32 %v1475, %v1545
    %v1732 = vsub.f32 %v1476, %v1548
    %v1733 = vsub.f32 %v1477, %v1551
    %v1734 = vsub.f32 %v1478, %v1554
    %v1735 = vsub.f32 %v1479, %v1557
    %v1736 = vsub.f32 %v1480, %v1560
    %v1737 = vsub.f32 %v1481, %v1563
    %v1738 = vsub.f32 %v1482, %v1566
    %v1739 = vsub.f32 %v1483, %v1569
    %v1740 = vsub.f32 %v1484, %v1572
    %v1741 = vsub.f32 %v1485, %v1575
    %v1742 = vsub.f32 %v1486, %v1578
    %v1743 = vsub.f32 %v1487, %v1581
    %v1744 = vsub.f32 %v1488, %v1584
    %v1745 = vsub.f32 %v1489, %v1587
    %v1746 = vsub.f32 %v1490, %v1590
    %v1747 = vsub.f32 %v1491, %v1593
    %v1748 = vsub.f32 %v1492, %v1596
    %v1749 = vsub.f32 %v1493, %v1599
    %v1750 = vsub.f32 %v1494, %v1602
    %v1751 = vsub.f32 %v1495, %v1605
    %v1752 = vsub.f32 %v1496, %v1608
    %v1753 = vsub.f32 %v1497, %v1611
    %v1754 = vsub.f32 %v1498, %v1614
    %v1755 = vsub.f32 %v1499, %v1617
    %v1756 = vsub.f32 %v1500, %v1620
    %v1757 = vsub.f32 %v1501, %v1623
    %v1758 = vsub.f32 %v1502, %v1626
    %v1759 = vsub.f32 %v1503, %v1629
    %v1760 = vsub.f32 %v1504, %v1632
    %v1761 = vsub.f32 %v1505, %v1635
    %v1762 = vsub.f32 %v1506, %v1638
    %v1763 = vsub.f32 %v1507, %v1641
    %v1764 = vsub.f32 %v1508, %v1644
    %v1765 = vsub.f32 %v1509, %v1647
    %v1766 = vsub.f32 %v1510, %v1650
    %v1767 = vsub.f32 %v1511, %v1653
    %v1768 = vsub.f32 %v1512, %v1656
    %v1769 = vsub.f32 %v1513, %v1659
    %v1770 = vsub.f32 %v1514, %v1662
    %v1771 = vsub.f32 %v1515, %v1665
    %v1772 = vsub.f32 %v1516, %v1668
    %v1773 = vsub.f32 %v1517, %v1671
    %v1774 = vsub.f32 %v1518, %v1674
    %v1775 = vsub.f32 %v1519, %v1677
    %v1776 = vsub.f32 %v1520, %v1680
    %v1777 = vsub.f32 %v1521, %v1683
    %v1778 = vsub.f32 %v1522, %v1686
    %v1779 = vsub.f32 %v1523, %v1689
    %v1780 = vsub.f32 %v1524, %v1692
    %v1781 = vsub.f32 %v1525, %v1695
    %v1782 = vsub.f32 %v1526, %v1698
    %v1783 = vsub.f32 %v1527, %v1701
    %v1784 = vsub.f32 %v1528, %v1704
    %v1785 = vsub.f32 %v1529, %v1707
    %v1786 = vsub.f32 %v1530, %v1710
    %v1787 = vsub.f32 %v1531, %v1713
    %v1788 = vsub.f32 %v1532, %v1716
    %v1789 = vsub.f32 %v1533, %v1719
    %v1790 = vsub.f32 %v1534, %v1722
    %v1791 = vsub.f32 %v1535, %v1725
    %v1792 = vsub.f32 %v1536, %v1728
    %v1793 = vmul.f32 %v1729, 1.442695
    %v1794 = vpow.pop %v1793
    %v1795 = vmul.f32 %v1730, 1.442695
    %v1796 = vpow.pop %v1795
    %v1797 = vmul.f32 %v1731, 1.442695
    %v1798 = vpow.pop %v1797
    %v1799 = vmul.f32 %v1732, 1.442695
    %v1800 = vpow.pop %v1799
    %v1801 = vmul.f32 %v1733, 1.442695
    %v1802 = vpow.pop %v1801
    %v1803 = vmul.f32 %v1734, 1.442695
    %v1804 = vpow.pop %v1803
    %v1805 = vmul.f32 %v1735, 1.442695
    %v1806 = vpow.pop %v1805
    %v1807 = vmul.f32 %v1736, 1.442695
    %v1808 = vpow.pop %v1807
    %v1809 = vmul.f32 %v1737, 1.442695
    %v1810 = vpow.pop %v1809
    %v1811 = vmul.f32 %v1738, 1.442695
    %v1812 = vpow.pop %v1811
    %v1813 = vmul.f32 %v1739, 1.442695
    %v1814 = vpow.pop %v1813
    %v1815 = vmul.f32 %v1740, 1.442695
    %v1816 = vpow.pop %v1815
    %v1817 = vmul.f32 %v1741, 1.442695
    %v1818 = vpow.pop %v1817
    %v1819 = vmul.f32 %v1742, 1.442695
    %v1820 = vpow.pop %v1819
    %v1821 = vmul.f32 %v1743, 1.442695
    %v1822 = vpow.pop %v1821
    %v1823 = vmul.f32 %v1744, 1.442695
    %v1824 = vpow.pop %v1823
    %v1825 = vmul.f32 %v1745, 1.442695
    %v1826 = vpow.pop %v1825
    %v1827 = vmul.f32 %v1746, 1.442695
    %v1828 = vpow.pop %v1827
    %v1829 = vmul.f32 %v1747, 1.442695
    %v1830 = vpow.pop %v1829
    %v1831 = vmul.f32 %v1748, 1.442695
    %v1832 = vpow.pop %v1831
    %v1833 = vmul.f32 %v1749, 1.442695
    %v1834 = vpow.pop %v1833
    %v1835 = vmul.f32 %v1750, 1.442695
    %v1836 = vpow.pop %v1835
    %v1837 = vmul.f32 %v1751, 1.442695
    %v1838 = vpow.pop %v1837
    %v1839 = vmul.f32 %v1752, 1.442695
    %v1840 = vpow.pop %v1839
    %v1841 = vmul.f32 %v1753, 1.442695
    %v1842 = vpow.pop %v1841
    %v1843 = vmul.f32 %v1754, 1.442695
    %v1844 = vpow.pop %v1843
    %v1845 = vmul.f32 %v1755, 1.442695
    %v1846 = vpow.pop %v1845
    %v1847 = vmul.f32 %v1756, 1.442695
    %v1848 = vpow.pop %v1847
    %v1849 = vmul.f32 %v1757, 1.442695
    %v1850 = vpow.pop %v1849
    %v1851 = vmul.f32 %v1758, 1.442695
    %v1852 = vpow.pop %v1851
    %v1853 = vmul.f32 %v1759, 1.442695
    %v1854 = vpow.pop %v1853
    %v1855 = vmul.f32 %v1760, 1.442695
    %v1856 = vpow.pop %v1855
    %v1857 = vmul.f32 %v1761, 1.442695
    %v1858 = vpow.pop %v1857
    %v1859 = vmul.f32 %v1762, 1.442695
    %v1860 = vpow.pop %v1859
    %v1861 = vmul.f32 %v1763, 1.442695
    %v1862 = vpow.pop %v1861
    %v1863 = vmul.f32 %v1764, 1.442695
    %v1864 = vpow.pop %v1863
    %v1865 = vmul.f32 %v1765, 1.442695
    %v1866 = vpow.pop %v1865
    %v1867 = vmul.f32 %v1766, 1.442695
    %v1868 = vpow.pop %v1867
    %v1869 = vmul.f32 %v1767, 1.442695
    %v1870 = vpow.pop %v1869
    %v1871 = vmul.f32 %v1768, 1.442695
    %v1872 = vpow.pop %v1871
    %v1873 = vmul.f32 %v1769, 1.442695
    %v1874 = vpow.pop %v1873
    %v1875 = vmul.f32 %v1770, 1.442695
    %v1876 = vpow.pop %v1875
    %v1877 = vmul.f32 %v1771, 1.442695
    %v1878 = vpow.pop %v1877
    %v1879 = vmul.f32 %v1772, 1.442695
    %v1880 = vpow.pop %v1879
    %v1881 = vmul.f32 %v1773, 1.442695
    %v1882 = vpow.pop %v1881
    %v1883 = vmul.f32 %v1774, 1.442695
    %v1884 = vpow.pop %v1883
    %v1885 = vmul.f32 %v1775, 1.442695
    %v1886 = vpow.pop %v1885
    %v1887 = vmul.f32 %v1776, 1.442695
    %v1888 = vpow.pop %v1887
    %v1889 = vmul.f32 %v1777, 1.442695
    %v1890 = vpow.pop %v1889
    %v1891 = vmul.f32 %v1778, 1.442695
    %v1892 = vpow.pop %v1891
    %v1893 = vmul.f32 %v1779, 1.442695
    %v1894 = vpow.pop %v1893
    %v1895 = vmul.f32 %v1780, 1.442695
    %v1896 = vpow.pop %v1895
    %v1897 = vmul.f32 %v1781, 1.442695
    %v1898 = vpow.pop %v1897
    %v1899 = vmul.f32 %v1782, 1.442695
    %v1900 = vpow.pop %v1899
    %v1901 = vmul.f32 %v1783, 1.442695
    %v1902 = vpow.pop %v1901
    %v1903 = vmul.f32 %v1784, 1.442695
    %v1904 = vpow.pop %v1903
    %v1905 = vmul.f32 %v1785, 1.442695
    %v1906 = vpow.pop %v1905
    %v1907 = vmul.f32 %v1786, 1.442695
    %v1908 = vpow.pop %v1907
    %v1909 = vmul.f32 %v1787, 1.442695
    %v1910 = vpow.pop %v1909
    %v1911 = vmul.f32 %v1788, 1.442695
    %v1912 = vpow.pop %v1911
    %v1913 = vmul.f32 %v1789, 1.442695
    %v1914 = vpow.pop %v1913
    %v1915 = vmul.f32 %v1790, 1.442695
    %v1916 = vpow.pop %v1915
    %v1917 = vmul.f32 %v1791, 1.442695
    %v1918 = vpow.pop %v1917
    %v1919 = vmul.f32 %v1792, 1.442695
    %v1920 = vpow.pop %v1919
    %v1921 = vsel %vm248, %v1794, 0.0
    %1922 = vadd.xlane.f32.xlu0 %v1921
    %v1923 = vpop.xlane.xlu0 %1922
    %v1924 = vsel %vm248, %v1796, 0.0
    %1925 = vadd.xlane.f32.xlu0 %v1924
    %v1926 = vpop.xlane.xlu0 %1925
    %v1927 = vsel %vm248, %v1798, 0.0
    %1928 = vadd.xlane.f32.xlu0 %v1927
    %v1929 = vpop.xlane.xlu0 %1928
    %v1930 = vsel %vm248, %v1800, 0.0
    %1931 = vadd.xlane.f32.xlu0 %v1930
    %v1932 = vpop.xlane.xlu0 %1931
    %v1933 = vsel %vm248, %v1802, 0.0
    %1934 = vadd.xlane.f32.xlu0 %v1933
    %v1935 = vpop.xlane.xlu0 %1934
    %v1936 = vsel %vm248, %v1804, 0.0
    %1937 = vadd.xlane.f32.xlu0 %v1936
    %v1938 = vpop.xlane.xlu0 %1937
    %v1939 = vsel %vm248, %v1806, 0.0
    %1940 = vadd.xlane.f32.xlu0 %v1939
    %v1941 = vpop.xlane.xlu0 %1940
    %v1942 = vsel %vm248, %v1808, 0.0
    %1943 = vadd.xlane.f32.xlu0 %v1942
    %v1944 = vpop.xlane.xlu0 %1943
    %v1945 = vsel %vm248, %v1810, 0.0
    %1946 = vadd.xlane.f32.xlu0 %v1945
    %v1947 = vpop.xlane.xlu0 %1946
    %v1948 = vsel %vm248, %v1812, 0.0
    %1949 = vadd.xlane.f32.xlu0 %v1948
    %v1950 = vpop.xlane.xlu0 %1949
    %v1951 = vsel %vm248, %v1814, 0.0
    %1952 = vadd.xlane.f32.xlu0 %v1951
    %v1953 = vpop.xlane.xlu0 %1952
    %v1954 = vsel %vm248, %v1816, 0.0
    %1955 = vadd.xlane.f32.xlu0 %v1954
    %v1956 = vpop.xlane.xlu0 %1955
    %v1957 = vsel %vm248, %v1818, 0.0
    %1958 = vadd.xlane.f32.xlu0 %v1957
    %v1959 = vpop.xlane.xlu0 %1958
    %v1960 = vsel %vm248, %v1820, 0.0
    %1961 = vadd.xlane.f32.xlu0 %v1960
    %v1962 = vpop.xlane.xlu0 %1961
    %v1963 = vsel %vm248, %v1822, 0.0
    %1964 = vadd.xlane.f32.xlu0 %v1963
    %v1965 = vpop.xlane.xlu0 %1964
    %v1966 = vsel %vm248, %v1824, 0.0
    %1967 = vadd.xlane.f32.xlu0 %v1966
    %v1968 = vpop.xlane.xlu0 %1967
    %v1969 = vsel %vm248, %v1826, 0.0
    %1970 = vadd.xlane.f32.xlu0 %v1969
    %v1971 = vpop.xlane.xlu0 %1970
    %v1972 = vsel %vm248, %v1828, 0.0
    %1973 = vadd.xlane.f32.xlu0 %v1972
    %v1974 = vpop.xlane.xlu0 %1973
    %v1975 = vsel %vm248, %v1830, 0.0
    %1976 = vadd.xlane.f32.xlu0 %v1975
    %v1977 = vpop.xlane.xlu0 %1976
    %v1978 = vsel %vm248, %v1832, 0.0
    %1979 = vadd.xlane.f32.xlu0 %v1978
    %v1980 = vpop.xlane.xlu0 %1979
    %v1981 = vsel %vm248, %v1834, 0.0
    %1982 = vadd.xlane.f32.xlu0 %v1981
    %v1983 = vpop.xlane.xlu0 %1982
    %v1984 = vsel %vm248, %v1836, 0.0
    %1985 = vadd.xlane.f32.xlu0 %v1984
    %v1986 = vpop.xlane.xlu0 %1985
    %v1987 = vsel %vm248, %v1838, 0.0
    %1988 = vadd.xlane.f32.xlu0 %v1987
    %v1989 = vpop.xlane.xlu0 %1988
    %v1990 = vsel %vm248, %v1840, 0.0
    %1991 = vadd.xlane.f32.xlu0 %v1990
    %v1992 = vpop.xlane.xlu0 %1991
    %v1993 = vsel %vm248, %v1842, 0.0
    %1994 = vadd.xlane.f32.xlu0 %v1993
    %v1995 = vpop.xlane.xlu0 %1994
    %v1996 = vsel %vm248, %v1844, 0.0
    %1997 = vadd.xlane.f32.xlu0 %v1996
    %v1998 = vpop.xlane.xlu0 %1997
    %v1999 = vsel %vm248, %v1846, 0.0
    %2000 = vadd.xlane.f32.xlu0 %v1999
    %v2001 = vpop.xlane.xlu0 %2000
    %v2002 = vsel %vm248, %v1848, 0.0
    %2003 = vadd.xlane.f32.xlu0 %v2002
    %v2004 = vpop.xlane.xlu0 %2003
    %v2005 = vsel %vm248, %v1850, 0.0
    %2006 = vadd.xlane.f32.xlu0 %v2005
    %v2007 = vpop.xlane.xlu0 %2006
    %v2008 = vsel %vm248, %v1852, 0.0
    %2009 = vadd.xlane.f32.xlu0 %v2008
    %v2010 = vpop.xlane.xlu0 %2009
    %v2011 = vsel %vm248, %v1854, 0.0
    %2012 = vadd.xlane.f32.xlu0 %v2011
    %v2013 = vpop.xlane.xlu0 %2012
    %v2014 = vsel %vm248, %v1856, 0.0
    %2015 = vadd.xlane.f32.xlu0 %v2014
    %v2016 = vpop.xlane.xlu0 %2015
    %v2017 = vsel %vm248, %v1858, 0.0
    %2018 = vadd.xlane.f32.xlu0 %v2017
    %v2019 = vpop.xlane.xlu0 %2018
    %v2020 = vsel %vm248, %v1860, 0.0
    %2021 = vadd.xlane.f32.xlu0 %v2020
    %v2022 = vpop.xlane.xlu0 %2021
    %v2023 = vsel %vm248, %v1862, 0.0
    %2024 = vadd.xlane.f32.xlu0 %v2023
    %v2025 = vpop.xlane.xlu0 %2024
    %v2026 = vsel %vm248, %v1864, 0.0
    %2027 = vadd.xlane.f32.xlu0 %v2026
    %v2028 = vpop.xlane.xlu0 %2027
    %v2029 = vsel %vm248, %v1866, 0.0
    %2030 = vadd.xlane.f32.xlu0 %v2029
    %v2031 = vpop.xlane.xlu0 %2030
    %v2032 = vsel %vm248, %v1868, 0.0
    %2033 = vadd.xlane.f32.xlu0 %v2032
    %v2034 = vpop.xlane.xlu0 %2033
    %v2035 = vsel %vm248, %v1870, 0.0
    %2036 = vadd.xlane.f32.xlu0 %v2035
    %v2037 = vpop.xlane.xlu0 %2036
    %v2038 = vsel %vm248, %v1872, 0.0
    %2039 = vadd.xlane.f32.xlu0 %v2038
    %v2040 = vpop.xlane.xlu0 %2039
    %v2041 = vsel %vm248, %v1874, 0.0
    %2042 = vadd.xlane.f32.xlu0 %v2041
    %v2043 = vpop.xlane.xlu0 %2042
    %v2044 = vsel %vm248, %v1876, 0.0
    %2045 = vadd.xlane.f32.xlu0 %v2044
    %v2046 = vpop.xlane.xlu0 %2045
    %v2047 = vsel %vm248, %v1878, 0.0
    %2048 = vadd.xlane.f32.xlu0 %v2047
    %v2049 = vpop.xlane.xlu0 %2048
    %v2050 = vsel %vm248, %v1880, 0.0
    %2051 = vadd.xlane.f32.xlu0 %v2050
    %v2052 = vpop.xlane.xlu0 %2051
    %v2053 = vsel %vm248, %v1882, 0.0
    %2054 = vadd.xlane.f32.xlu0 %v2053
    %v2055 = vpop.xlane.xlu0 %2054
    %v2056 = vsel %vm248, %v1884, 0.0
    %2057 = vadd.xlane.f32.xlu0 %v2056
    %v2058 = vpop.xlane.xlu0 %2057
    %v2059 = vsel %vm248, %v1886, 0.0
    %2060 = vadd.xlane.f32.xlu0 %v2059
    %v2061 = vpop.xlane.xlu0 %2060
    %v2062 = vsel %vm248, %v1888, 0.0
    %2063 = vadd.xlane.f32.xlu0 %v2062
    %v2064 = vpop.xlane.xlu0 %2063
    %v2065 = vsel %vm248, %v1890, 0.0
    %2066 = vadd.xlane.f32.xlu0 %v2065
    %v2067 = vpop.xlane.xlu0 %2066
    %v2068 = vsel %vm248, %v1892, 0.0
    %2069 = vadd.xlane.f32.xlu0 %v2068
    %v2070 = vpop.xlane.xlu0 %2069
    %v2071 = vsel %vm248, %v1894, 0.0
    %2072 = vadd.xlane.f32.xlu0 %v2071
    %v2073 = vpop.xlane.xlu0 %2072
    %v2074 = vsel %vm248, %v1896, 0.0
    %2075 = vadd.xlane.f32.xlu0 %v2074
    %v2076 = vpop.xlane.xlu0 %2075
    %v2077 = vsel %vm248, %v1898, 0.0
    %2078 = vadd.xlane.f32.xlu0 %v2077
    %v2079 = vpop.xlane.xlu0 %2078
    %v2080 = vsel %vm248, %v1900, 0.0
    %2081 = vadd.xlane.f32.xlu0 %v2080
    %v2082 = vpop.xlane.xlu0 %2081
    %v2083 = vsel %vm248, %v1902, 0.0
    %2084 = vadd.xlane.f32.xlu0 %v2083
    %v2085 = vpop.xlane.xlu0 %2084
    %v2086 = vsel %vm248, %v1904, 0.0
    %2087 = vadd.xlane.f32.xlu0 %v2086
    %v2088 = vpop.xlane.xlu0 %2087
    %v2089 = vsel %vm248, %v1906, 0.0
    %2090 = vadd.xlane.f32.xlu0 %v2089
    %v2091 = vpop.xlane.xlu0 %2090
    %v2092 = vsel %vm248, %v1908, 0.0
    %2093 = vadd.xlane.f32.xlu0 %v2092
    %v2094 = vpop.xlane.xlu0 %2093
    %v2095 = vsel %vm248, %v1910, 0.0
    %2096 = vadd.xlane.f32.xlu0 %v2095
    %v2097 = vpop.xlane.xlu0 %2096
    %v2098 = vsel %vm248, %v1912, 0.0
    %2099 = vadd.xlane.f32.xlu0 %v2098
    %v2100 = vpop.xlane.xlu0 %2099
    %v2101 = vsel %vm248, %v1914, 0.0
    %2102 = vadd.xlane.f32.xlu0 %v2101
    %v2103 = vpop.xlane.xlu0 %2102
    %v2104 = vsel %vm248, %v1916, 0.0
    %2105 = vadd.xlane.f32.xlu0 %v2104
    %v2106 = vpop.xlane.xlu0 %2105
    %v2107 = vsel %vm248, %v1918, 0.0
    %2108 = vadd.xlane.f32.xlu0 %v2107
    %v2109 = vpop.xlane.xlu0 %2108
    %v2110 = vsel %vm248, %v1920, 0.0
    %2111 = vadd.xlane.f32.xlu0 %v2110
    %v2112 = vpop.xlane.xlu0 %2111
    %v2113 = vrcp.pop %v1923
    %v2114 = vmul.f32 %v1794, %v2113
    %v2115 = vrcp.pop %v1926
    %v2116 = vmul.f32 %v1796, %v2115
    %v2117 = vrcp.pop %v1929
    %v2118 = vmul.f32 %v1798, %v2117
    %v2119 = vrcp.pop %v1932
    %v2120 = vmul.f32 %v1800, %v2119
    %v2121 = vrcp.pop %v1935
    %v2122 = vmul.f32 %v1802, %v2121
    %v2123 = vrcp.pop %v1938
    %v2124 = vmul.f32 %v1804, %v2123
    %v2125 = vrcp.pop %v1941
    %v2126 = vmul.f32 %v1806, %v2125
    %v2127 = vrcp.pop %v1944
    %v2128 = vmul.f32 %v1808, %v2127
    %v2129 = vrcp.pop %v1947
    %v2130 = vmul.f32 %v1810, %v2129
    %v2131 = vrcp.pop %v1950
    %v2132 = vmul.f32 %v1812, %v2131
    %v2133 = vrcp.pop %v1953
    %v2134 = vmul.f32 %v1814, %v2133
    %v2135 = vrcp.pop %v1956
    %v2136 = vmul.f32 %v1816, %v2135
    %v2137 = vrcp.pop %v1959
    %v2138 = vmul.f32 %v1818, %v2137
    %v2139 = vrcp.pop %v1962
    %v2140 = vmul.f32 %v1820, %v2139
    %v2141 = vrcp.pop %v1965
    %v2142 = vmul.f32 %v1822, %v2141
    %v2143 = vrcp.pop %v1968
    %v2144 = vmul.f32 %v1824, %v2143
    %v2145 = vrcp.pop %v1971
    %v2146 = vmul.f32 %v1826, %v2145
    %v2147 = vrcp.pop %v1974
    %v2148 = vmul.f32 %v1828, %v2147
    %v2149 = vrcp.pop %v1977
    %v2150 = vmul.f32 %v1830, %v2149
    %v2151 = vrcp.pop %v1980
    %v2152 = vmul.f32 %v1832, %v2151
    %v2153 = vrcp.pop %v1983
    %v2154 = vmul.f32 %v1834, %v2153
    %v2155 = vrcp.pop %v1986
    %v2156 = vmul.f32 %v1836, %v2155
    %v2157 = vrcp.pop %v1989
    %v2158 = vmul.f32 %v1838, %v2157
    %v2159 = vrcp.pop %v1992
    %v2160 = vmul.f32 %v1840, %v2159
    %v2161 = vrcp.pop %v1995
    %v2162 = vmul.f32 %v1842, %v2161
    %v2163 = vrcp.pop %v1998
    %v2164 = vmul.f32 %v1844, %v2163
    %v2165 = vrcp.pop %v2001
    %v2166 = vmul.f32 %v1846, %v2165
    %v2167 = vrcp.pop %v2004
    %v2168 = vmul.f32 %v1848, %v2167
    %v2169 = vrcp.pop %v2007
    %v2170 = vmul.f32 %v1850, %v2169
    %v2171 = vrcp.pop %v2010
    %v2172 = vmul.f32 %v1852, %v2171
    %v2173 = vrcp.pop %v2013
    %v2174 = vmul.f32 %v1854, %v2173
    %v2175 = vrcp.pop %v2016
    %v2176 = vmul.f32 %v1856, %v2175
    %v2177 = vrcp.pop %v2019
    %v2178 = vmul.f32 %v1858, %v2177
    %v2179 = vrcp.pop %v2022
    %v2180 = vmul.f32 %v1860, %v2179
    %v2181 = vrcp.pop %v2025
    %v2182 = vmul.f32 %v1862, %v2181
    %v2183 = vrcp.pop %v2028
    %v2184 = vmul.f32 %v1864, %v2183
    %v2185 = vrcp.pop %v2031
    %v2186 = vmul.f32 %v1866, %v2185
    %v2187 = vrcp.pop %v2034
    %v2188 = vmul.f32 %v1868, %v2187
    %v2189 = vrcp.pop %v2037
    %v2190 = vmul.f32 %v1870, %v2189
    %v2191 = vrcp.pop %v2040
    %v2192 = vmul.f32 %v1872, %v2191
    %v2193 = vrcp.pop %v2043
    %v2194 = vmul.f32 %v1874, %v2193
    %v2195 = vrcp.pop %v2046
    %v2196 = vmul.f32 %v1876, %v2195
    %v2197 = vrcp.pop %v2049
    %v2198 = vmul.f32 %v1878, %v2197
    %v2199 = vrcp.pop %v2052
    %v2200 = vmul.f32 %v1880, %v2199
    %v2201 = vrcp.pop %v2055
    %v2202 = vmul.f32 %v1882, %v2201
    %v2203 = vrcp.pop %v2058
    %v2204 = vmul.f32 %v1884, %v2203
    %v2205 = vrcp.pop %v2061
    %v2206 = vmul.f32 %v1886, %v2205
    %v2207 = vrcp.pop %v2064
    %v2208 = vmul.f32 %v1888, %v2207
    %v2209 = vrcp.pop %v2067
    %v2210 = vmul.f32 %v1890, %v2209
    %v2211 = vrcp.pop %v2070
    %v2212 = vmul.f32 %v1892, %v2211
    %v2213 = vrcp.pop %v2073
    %v2214 = vmul.f32 %v1894, %v2213
    %v2215 = vrcp.pop %v2076
    %v2216 = vmul.f32 %v1896, %v2215
    %v2217 = vrcp.pop %v2079
    %v2218 = vmul.f32 %v1898, %v2217
    %v2219 = vrcp.pop %v2082
    %v2220 = vmul.f32 %v1900, %v2219
    %v2221 = vrcp.pop %v2085
    %v2222 = vmul.f32 %v1902, %v2221
    %v2223 = vrcp.pop %v2088
    %v2224 = vmul.f32 %v1904, %v2223
    %v2225 = vrcp.pop %v2091
    %v2226 = vmul.f32 %v1906, %v2225
    %v2227 = vrcp.pop %v2094
    %v2228 = vmul.f32 %v1908, %v2227
    %v2229 = vrcp.pop %v2097
    %v2230 = vmul.f32 %v1910, %v2229
    %v2231 = vrcp.pop %v2100
    %v2232 = vmul.f32 %v1912, %v2231
    %v2233 = vrcp.pop %v2103
    %v2234 = vmul.f32 %v1914, %v2233
    %v2235 = vrcp.pop %v2106
    %v2236 = vmul.f32 %v1916, %v2235
    %v2237 = vrcp.pop %v2109
    %v2238 = vmul.f32 %v1918, %v2237
    %v2239 = vrcp.pop %v2112
    %v2240 = vmul.f32 %v1920, %v2239
    %v2242 = vsel %vm248, %v2114, 0
    %v2245 = vsel %vm248, %v2116, 0
    %v2248 = vsel %vm248, %v2118, 0
    %v2251 = vsel %vm248, %v2120, 0
    %v2254 = vsel %vm248, %v2122, 0
    %v2257 = vsel %vm248, %v2124, 0
    %v2260 = vsel %vm248, %v2126, 0
    %v2263 = vsel %vm248, %v2128, 0
    %2265 = vmatprep.subr.mxu0 0.0
    %2266 = vmatpush1.msra.mxu0 %v184
    %2267 = vmatprep.subr.mxu0 0.0
    %2268 = vmatpush1.msra.mxu0 %v185
    %2269 = vmatprep.subr.mxu0 0.0
    %2270 = vmatpush1.msra.mxu0 %v186
    %2271 = vmatprep.subr.mxu0 0.0
    %2272 = vmatpush1.msra.mxu0 %v187
    %2273 = vmatprep.subr.mxu0 0.0
    %2274 = vmatpush1.msra.mxu0 %v188
    %2275 = vmatprep.subr.mxu0 0.0
    %2276 = vmatpush1.msra.mxu0 %v189
    %2277 = vmatprep.subr.mxu0 0.0
    %2278 = vmatpush1.msra.mxu0 %v190
    %2279 = vmatprep.subr.mxu0 0.0
    %2280 = vmatpush1.msra.mxu0 %v191
    %2281 = vmatprep.subr.mxu0 0.0
    %2282 = vmatpush1.msra.mxu0 0.0
    %2283 = vmatprep.subr.mxu0 0.0
    %2284 = vmatpush1.msra.mxu0 0.0
    %2285 = vmatprep.subr.mxu0 0.0
    %2286 = vmatpush1.msra.mxu0 0.0
    %2287 = vmatprep.subr.mxu0 0.0
    %2288 = vmatpush1.msra.mxu0 0.0
    %2289 = vmatprep.subr.mxu0 0.0
    %2290 = vmatpush1.msra.mxu0 0.0
    %2291 = vmatprep.subr.mxu0 0.0
    %2292 = vmatpush1.msra.mxu0 0.0
    %2293 = vmatprep.subr.mxu0 0.0
    %2294 = vmatpush1.msra.mxu0 0.0
    %2295 = vmatprep.subr.mxu0 0.0
    %2296 = vmatpush1.msra.mxu0 0.0
    %2297 = vmatprep.subr.mxu0 0.0
    %2298 = vmatpush1.msra.mxu0 0.0
    %2299 = vmatprep.subr.mxu0 0.0
    %2300 = vmatpush1.msra.mxu0 0.0
    %2301 = vmatprep.subr.mxu0 0.0
    %2302 = vmatpush1.msra.mxu0 0.0
    %2303 = vmatprep.subr.mxu0 0.0
    %2304 = vmatpush1.msra.mxu0 0.0
    %2305 = vmatprep.subr.mxu0 0.0
    %2306 = vmatpush1.msra.mxu0 0.0
    %2307 = vmatprep.subr.mxu0 0.0
    %2308 = vmatpush1.msra.mxu0 0.0
    %2309 = vmatprep.subr.mxu0 0.0
    %2310 = vmatpush1.msra.mxu0 0.0
    %2311 = vmatprep.subr.mxu0 0.0
    %2312 = vmatpush1.msra.mxu0 0.0
    %2313 = vmatprep.subr.mxu0 0.0
    %2314 = vmatpush1.msra.mxu0 0.0
    %2315 = vmatprep.subr.mxu0 0.0
    %2316 = vmatpush1.msra.mxu0 0.0
    %2317 = vmatprep.subr.mxu0 0.0
    %2318 = vmatpush1.msra.mxu0 0.0
    %2319 = vmatprep.subr.mxu0 0.0
    %2320 = vmatpush1.msra.mxu0 0.0
    %2321 = vmatprep.subr.mxu0 0.0
    %2322 = vmatpush1.msra.mxu0 0.0
    %2323 = vmatprep.subr.mxu0 0.0
    %2324 = vmatpush1.msra.mxu0 0.0
    %2325 = vmatprep.subr.mxu0 0.0
    %2326 = vmatpush1.msra.mxu0 0.0
    %2327 = vmatprep.subr.mxu0 0.0
    %2328 = vmatpush1.msra.mxu0 0.0
    %2329 = vmatprep.mubr.f32.mxu0 0.0
    %2330 = vmatmul.mubr.f32.gmra.mrb[0].mxu0 %v2242
    %v2331 = vpop.f32.mrb[0].mxu0
    %v2332 = vadd.f32 0.0, %v2331
    %v2333 = vpop.f32.mrb[0].mxu0
    %2334 = vmatprep.mubr.f32.mxu0 0.0
    %2335 = vmatmul.mubr.f32.gmra.mrb[0].mxu0 %v2245
    %v2336 = vpop.f32.mrb[0].mxu0
    %v2337 = vadd.f32 0.0, %v2336
    %v2338 = vpop.f32.mrb[0].mxu0
    %2339 = vmatprep.mubr.f32.mxu0 0.0
    %2340 = vmatmul.mubr.f32.gmra.mrb[0].mxu0 %v2248
    %v2341 = vpop.f32.mrb[0].mxu0
    %v2342 = vadd.f32 0.0, %v2341
    %v2343 = vpop.f32.mrb[0].mxu0
    %2344 = vmatprep.mubr.f32.mxu0 0.0
    %2345 = vmatmul.mubr.f32.gmra.mrb[0].mxu0 %v2251
    %v2346 = vpop.f32.mrb[0].mxu0
    %v2347 = vadd.f32 0.0, %v2346
    %v2348 = vpop.f32.mrb[0].mxu0
    %2349 = vmatprep.mubr.f32.mxu0 0.0
    %2350 = vmatmul.mubr.f32.gmra.mrb[0].mxu0 %v2254
    %v2351 = vpop.f32.mrb[0].mxu0
    %v2352 = vadd.f32 0.0, %v2351
    %v2353 = vpop.f32.mrb[0].mxu0
    %2354 = vmatprep.mubr.f32.mxu0 0.0
    %2355 = vmatmul.mubr.f32.gmra.mrb[0].mxu0 %v2257
    %v2356 = vpop.f32.mrb[0].mxu0
    %v2357 = vadd.f32 0.0, %v2356
    %v2358 = vpop.f32.mrb[0].mxu0
    %2359 = vmatprep.mubr.f32.mxu0 0.0
    %2360 = vmatmul.mubr.f32.gmra.mrb[0].mxu0 %v2260
    %v2361 = vpop.f32.mrb[0].mxu0
    %v2362 = vadd.f32 0.0, %v2361
    %v2363 = vpop.f32.mrb[0].mxu0
    %2364 = vmatprep.mubr.f32.mxu0 0.0
    %2365 = vmatmul.mubr.f32.gmra.mrb[0].mxu0 %v2263
    %v2366 = vpop.f32.mrb[0].mxu0
    %v2367 = vadd.f32 0.0, %v2366
    %v2368 = vpop.f32.mrb[0].mxu0
    %2369 = vdwg.mxu0
    %v2371 = vsel %vm248, %v2130, 0
    %v2374 = vsel %vm248, %v2132, 0
    %v2377 = vsel %vm248, %v2134, 0
    %v2380 = vsel %vm248, %v2136, 0
    %v2383 = vsel %vm248, %v2138, 0
    %v2386 = vsel %vm248, %v2140, 0
    %v2389 = vsel %vm248, %v2142, 0
    %v2392 = vsel %vm248, %v2144, 0
    %2394 = vmatprep.subr.mxu0 0.0
    %2395 = vmatpush1.msra.mxu0 %v192
    %2396 = vmatprep.subr.mxu0 0.0
    %2397 = vmatpush1.msra.mxu0 %v193
    %2398 = vmatprep.subr.mxu0 0.0
    %2399 = vmatpush1.msra.mxu0 %v194
    %2400 = vmatprep.subr.mxu0 0.0
    %2401 = vmatpush1.msra.mxu0 %v195
    %2402 = vmatprep.subr.mxu0 0.0
    %2403 = vmatpush1.msra.mxu0 %v196
    %2404 = vmatprep.subr.mxu0 0.0
    %2405 = vmatpush1.msra.mxu0 %v197
    %2406 = vmatprep.subr.mxu0 0.0
    %2407 = vmatpush1.msra.mxu0 %v198
    %2408 = vmatprep.subr.mxu0 0.0
    %2409 = vmatpush1.msra.mxu0 %v199
    %2410 = vmatprep.subr.mxu0 0.0
    %2411 = vmatpush1.msra.mxu0 0.0
    %2412 = vmatprep.subr.mxu0 0.0
    %2413 = vmatpush1.msra.mxu0 0.0
    %2414 = vmatprep.subr.mxu0 0.0
    %2415 = vmatpush1.msra.mxu0 0.0
    %2416 = vmatprep.subr.mxu0 0.0
    %2417 = vmatpush1.msra.mxu0 0.0
    %2418 = vmatprep.subr.mxu0 0.0
    %2419 = vmatpush1.msra.mxu0 0.0
    %2420 = vmatprep.subr.mxu0 0.0
    %2421 = vmatpush1.msra.mxu0 0.0
    %2422 = vmatprep.subr.mxu0 0.0
    %2423 = vmatpush1.msra.mxu0 0.0
    %2424 = vmatprep.subr.mxu0 0.0
    %2425 = vmatpush1.msra.mxu0 0.0
    %2426 = vmatprep.subr.mxu0 0.0
    %2427 = vmatpush1.msra.mxu0 0.0
    %2428 = vmatprep.subr.mxu0 0.0
    %2429 = vmatpush1.msra.mxu0 0.0
    %2430 = vmatprep.subr.mxu0 0.0
    %2431 = vmatpush1.msra.mxu0 0.0
    %2432 = vmatprep.subr.mxu0 0.0
    %2433 = vmatpush1.msra.mxu0 0.0
    %2434 = vmatprep.subr.mxu0 0.0
    %2435 = vmatpush1.msra.mxu0 0.0
    %2436 = vmatprep.subr.mxu0 0.0
    %2437 = vmatpush1.msra.mxu0 0.0
    %2438 = vmatprep.subr.mxu0 0.0
    %2439 = vmatpush1.msra.mxu0 0.0
    %2440 = vmatprep.subr.mxu0 0.0
    %2441 = vmatpush1.msra.mxu0 0.0
    %2442 = vmatprep.subr.mxu0 0.0
    %2443 = vmatpush1.msra.mxu0 0.0
    %2444 = vmatprep.subr.mxu0 0.0
    %2445 = vmatpush1.msra.mxu0 0.0
    %2446 = vmatprep.subr.mxu0 0.0
    %2447 = vmatpush1.msra.mxu0 0.0
    %2448 = vmatprep.subr.mxu0 0.0
    %2449 = vmatpush1.msra.mxu0 0.0
    %2450 = vmatprep.subr.mxu0 0.0
    %2451 = vmatpush1.msra.mxu0 0.0
    %2452 = vmatprep.subr.mxu0 0.0
    %2453 = vmatpush1.msra.mxu0 0.0
    %2454 = vmatprep.subr.mxu0 0.0
    %2455 = vmatpush1.msra.mxu0 0.0
    %2456 = vmatprep.subr.mxu0 0.0
    %2457 = vmatpush1.msra.mxu0 0.0
    %2458 = vmatprep.mubr.f32.mxu0 0.0
    %2459 = vmatmul.mubr.f32.gmra.mrb[0].mxu0 %v2371
    %v2460 = vpop.f32.mrb[0].mxu0
    %v2461 = vadd.f32 0.0, %v2460
    %v2462 = vpop.f32.mrb[0].mxu0
    %2463 = vmatprep.mubr.f32.mxu0 0.0
    %2464 = vmatmul.mubr.f32.gmra.mrb[0].mxu0 %v2374
    %v2465 = vpop.f32.mrb[0].mxu0
    %v2466 = vadd.f32 0.0, %v2465
    %v2467 = vpop.f32.mrb[0].mxu0
    %2468 = vmatprep.mubr.f32.mxu0 0.0
    %2469 = vmatmul.mubr.f32.gmra.mrb[0].mxu0 %v2377
    %v2470 = vpop.f32.mrb[0].mxu0
    %v2471 = vadd.f32 0.0, %v2470
    %v2472 = vpop.f32.mrb[0].mxu0
    %2473 = vmatprep.mubr.f32.mxu0 0.0
    %2474 = vmatmul.mubr.f32.gmra.mrb[0].mxu0 %v2380
    %v2475 = vpop.f32.mrb[0].mxu0
    %v2476 = vadd.f32 0.0, %v2475
    %v2477 = vpop.f32.mrb[0].mxu0
    %2478 = vmatprep.mubr.f32.mxu0 0.0
    %2479 = vmatmul.mubr.f32.gmra.mrb[0].mxu0 %v2383
    %v2480 = vpop.f32.mrb[0].mxu0
    %v2481 = vadd.f32 0.0, %v2480
    %v2482 = vpop.f32.mrb[0].mxu0
    %2483 = vmatprep.mubr.f32.mxu0 0.0
    %2484 = vmatmul.mubr.f32.gmra.mrb[0].mxu0 %v2386
    %v2485 = vpop.f32.mrb[0].mxu0
    %v2486 = vadd.f32 0.0, %v2485
    %v2487 = vpop.f32.mrb[0].mxu0
    %2488 = vmatprep.mubr.f32.mxu0 0.0
    %2489 = vmatmul.mubr.f32.gmra.mrb[0].mxu0 %v2389
    %v2490 = vpop.f32.mrb[0].mxu0
    %v2491 = vadd.f32 0.0, %v2490
    %v2492 = vpop.f32.mrb[0].mxu0
    %2493 = vmatprep.mubr.f32.mxu0 0.0
    %2494 = vmatmul.mubr.f32.gmra.mrb[0].mxu0 %v2392
    %v2495 = vpop.f32.mrb[0].mxu0
    %v2496 = vadd.f32 0.0, %v2495
    %v2497 = vpop.f32.mrb[0].mxu0
    %2498 = vdwg.mxu0
    %v2500 = vsel %vm248, %v2146, 0
    %v2503 = vsel %vm248, %v2148, 0
    %v2506 = vsel %vm248, %v2150, 0
    %v2509 = vsel %vm248, %v2152, 0
    %v2512 = vsel %vm248, %v2154, 0
    %v2515 = vsel %vm248, %v2156, 0
    %v2518 = vsel %vm248, %v2158, 0
    %v2521 = vsel %vm248, %v2160, 0
    %2523 = vmatprep.subr.mxu0 0.0
    %2524 = vmatpush1.msra.mxu0 %v200
    %2525 = vmatprep.subr.mxu0 0.0
    %2526 = vmatpush1.msra.mxu0 %v201
    %2527 = vmatprep.subr.mxu0 0.0
    %2528 = vmatpush1.msra.mxu0 %v202
    %2529 = vmatprep.subr.mxu0 0.0
    %2530 = vmatpush1.msra.mxu0 %v203
    %2531 = vmatprep.subr.mxu0 0.0
    %2532 = vmatpush1.msra.mxu0 %v204
    %2533 = vmatprep.subr.mxu0 0.0
    %2534 = vmatpush1.msra.mxu0 %v205
    %2535 = vmatprep.subr.mxu0 0.0
    %2536 = vmatpush1.msra.mxu0 %v206
    %2537 = vmatprep.subr.mxu0 0.0
    %2538 = vmatpush1.msra.mxu0 %v207
    %2539 = vmatprep.subr.mxu0 0.0
    %2540 = vmatpush1.msra.mxu0 0.0
    %2541 = vmatprep.subr.mxu0 0.0
    %2542 = vmatpush1.msra.mxu0 0.0
    %2543 = vmatprep.subr.mxu0 0.0
    %2544 = vmatpush1.msra.mxu0 0.0
    %2545 = vmatprep.subr.mxu0 0.0
    %2546 = vmatpush1.msra.mxu0 0.0
    %2547 = vmatprep.subr.mxu0 0.0
    %2548 = vmatpush1.msra.mxu0 0.0
    %2549 = vmatprep.subr.mxu0 0.0
    %2550 = vmatpush1.msra.mxu0 0.0
    %2551 = vmatprep.subr.mxu0 0.0
    %2552 = vmatpush1.msra.mxu0 0.0
    %2553 = vmatprep.subr.mxu0 0.0
    %2554 = vmatpush1.msra.mxu0 0.0
    %2555 = vmatprep.subr.mxu0 0.0
    %2556 = vmatpush1.msra.mxu0 0.0
    %2557 = vmatprep.subr.mxu0 0.0
    %2558 = vmatpush1.msra.mxu0 0.0
    %2559 = vmatprep.subr.mxu0 0.0
    %2560 = vmatpush1.msra.mxu0 0.0
    %2561 = vmatprep.subr.mxu0 0.0
    %2562 = vmatpush1.msra.mxu0 0.0
    %2563 = vmatprep.subr.mxu0 0.0
    %2564 = vmatpush1.msra.mxu0 0.0
    %2565 = vmatprep.subr.mxu0 0.0
    %2566 = vmatpush1.msra.mxu0 0.0
    %2567 = vmatprep.subr.mxu0 0.0
    %2568 = vmatpush1.msra.mxu0 0.0
    %2569 = vmatprep.subr.mxu0 0.0
    %2570 = vmatpush1.msra.mxu0 0.0
    %2571 = vmatprep.subr.mxu0 0.0
    %2572 = vmatpush1.msra.mxu0 0.0
    %2573 = vmatprep.subr.mxu0 0.0
    %2574 = vmatpush1.msra.mxu0 0.0
    %2575 = vmatprep.subr.mxu0 0.0
    %2576 = vmatpush1.msra.mxu0 0.0
    %2577 = vmatprep.subr.mxu0 0.0
    %2578 = vmatpush1.msra.mxu0 0.0
    %2579 = vmatprep.subr.mxu0 0.0
    %2580 = vmatpush1.msra.mxu0 0.0
    %2581 = vmatprep.subr.mxu0 0.0
    %2582 = vmatpush1.msra.mxu0 0.0
    %2583 = vmatprep.subr.mxu0 0.0
    %2584 = vmatpush1.msra.mxu0 0.0
    %2585 = vmatprep.subr.mxu0 0.0
    %2586 = vmatpush1.msra.mxu0 0.0
    %2587 = vmatprep.mubr.f32.mxu0 0.0
    %2588 = vmatmul.mubr.f32.gmra.mrb[0].mxu0 %v2500
    %v2589 = vpop.f32.mrb[0].mxu0
    %v2590 = vadd.f32 0.0, %v2589
    %v2591 = vpop.f32.mrb[0].mxu0
    %2592 = vmatprep.mubr.f32.mxu0 0.0
    %2593 = vmatmul.mubr.f32.gmra.mrb[0].mxu0 %v2503
    %v2594 = vpop.f32.mrb[0].mxu0
    %v2595 = vadd.f32 0.0, %v2594
    %v2596 = vpop.f32.mrb[0].mxu0
    %2597 = vmatprep.mubr.f32.mxu0 0.0
    %2598 = vmatmul.mubr.f32.gmra.mrb[0].mxu0 %v2506
    %v2599 = vpop.f32.mrb[0].mxu0
    %v2600 = vadd.f32 0.0, %v2599
    %v2601 = vpop.f32.mrb[0].mxu0
    %2602 = vmatprep.mubr.f32.mxu0 0.0
    %2603 = vmatmul.mubr.f32.gmra.mrb[0].mxu0 %v2509
    %v2604 = vpop.f32.mrb[0].mxu0
    %v2605 = vadd.f32 0.0, %v2604
    %v2606 = vpop.f32.mrb[0].mxu0
    %2607 = vmatprep.mubr.f32.mxu0 0.0
    %2608 = vmatmul.mubr.f32.gmra.mrb[0].mxu0 %v2512
    %v2609 = vpop.f32.mrb[0].mxu0
    %v2610 = vadd.f32 0.0, %v2609
    %v2611 = vpop.f32.mrb[0].mxu0
    %2612 = vmatprep.mubr.f32.mxu0 0.0
    %2613 = vmatmul.mubr.f32.gmra.mrb[0].mxu0 %v2515
    %v2614 = vpop.f32.mrb[0].mxu0
    %v2615 = vadd.f32 0.0, %v2614
    %v2616 = vpop.f32.mrb[0].mxu0
    %2617 = vmatprep.mubr.f32.mxu0 0.0
    %2618 = vmatmul.mubr.f32.gmra.mrb[0].mxu0 %v2518
    %v2619 = vpop.f32.mrb[0].mxu0
    %v2620 = vadd.f32 0.0, %v2619
    %v2621 = vpop.f32.mrb[0].mxu0
    %2622 = vmatprep.mubr.f32.mxu0 0.0
    %2623 = vmatmul.mubr.f32.gmra.mrb[0].mxu0 %v2521
    %v2624 = vpop.f32.mrb[0].mxu0
    %v2625 = vadd.f32 0.0, %v2624
    %v2626 = vpop.f32.mrb[0].mxu0
    %2627 = vdwg.mxu0
    %v2629 = vsel %vm248, %v2162, 0
    %v2632 = vsel %vm248, %v2164, 0
    %v2635 = vsel %vm248, %v2166, 0
    %v2638 = vsel %vm248, %v2168, 0
    %v2641 = vsel %vm248, %v2170, 0
    %v2644 = vsel %vm248, %v2172, 0
    %v2647 = vsel %vm248, %v2174, 0
    %v2650 = vsel %vm248, %v2176, 0
    %2652 = vmatprep.subr.mxu0 0.0
    %2653 = vmatpush1.msra.mxu0 %v208
    %2654 = vmatprep.subr.mxu0 0.0
    %2655 = vmatpush1.msra.mxu0 %v209
    %2656 = vmatprep.subr.mxu0 0.0
    %2657 = vmatpush1.msra.mxu0 %v210
    %2658 = vmatprep.subr.mxu0 0.0
    %2659 = vmatpush1.msra.mxu0 %v211
    %2660 = vmatprep.subr.mxu0 0.0
    %2661 = vmatpush1.msra.mxu0 %v212
    %2662 = vmatprep.subr.mxu0 0.0
    %2663 = vmatpush1.msra.mxu0 %v213
    %2664 = vmatprep.subr.mxu0 0.0
    %2665 = vmatpush1.msra.mxu0 %v214
    %2666 = vmatprep.subr.mxu0 0.0
    %2667 = vmatpush1.msra.mxu0 %v215
    %2668 = vmatprep.subr.mxu0 0.0
    %2669 = vmatpush1.msra.mxu0 0.0
    %2670 = vmatprep.subr.mxu0 0.0
    %2671 = vmatpush1.msra.mxu0 0.0
    %2672 = vmatprep.subr.mxu0 0.0
    %2673 = vmatpush1.msra.mxu0 0.0
    %2674 = vmatprep.subr.mxu0 0.0
    %2675 = vmatpush1.msra.mxu0 0.0
    %2676 = vmatprep.subr.mxu0 0.0
    %2677 = vmatpush1.msra.mxu0 0.0
    %2678 = vmatprep.subr.mxu0 0.0
    %2679 = vmatpush1.msra.mxu0 0.0
    %2680 = vmatprep.subr.mxu0 0.0
    %2681 = vmatpush1.msra.mxu0 0.0
    %2682 = vmatprep.subr.mxu0 0.0
    %2683 = vmatpush1.msra.mxu0 0.0
    %2684 = vmatprep.subr.mxu0 0.0
    %2685 = vmatpush1.msra.mxu0 0.0
    %2686 = vmatprep.subr.mxu0 0.0
    %2687 = vmatpush1.msra.mxu0 0.0
    %2688 = vmatprep.subr.mxu0 0.0
    %2689 = vmatpush1.msra.mxu0 0.0
    %2690 = vmatprep.subr.mxu0 0.0
    %2691 = vmatpush1.msra.mxu0 0.0
    %2692 = vmatprep.subr.mxu0 0.0
    %2693 = vmatpush1.msra.mxu0 0.0
    %2694 = vmatprep.subr.mxu0 0.0
    %2695 = vmatpush1.msra.mxu0 0.0
    %2696 = vmatprep.subr.mxu0 0.0
    %2697 = vmatpush1.msra.mxu0 0.0
    %2698 = vmatprep.subr.mxu0 0.0
    %2699 = vmatpush1.msra.mxu0 0.0
    %2700 = vmatprep.subr.mxu0 0.0
    %2701 = vmatpush1.msra.mxu0 0.0
    %2702 = vmatprep.subr.mxu0 0.0
    %2703 = vmatpush1.msra.mxu0 0.0
    %2704 = vmatprep.subr.mxu0 0.0
    %2705 = vmatpush1.msra.mxu0 0.0
    %2706 = vmatprep.subr.mxu0 0.0
    %2707 = vmatpush1.msra.mxu0 0.0
    %2708 = vmatprep.subr.mxu0 0.0
    %2709 = vmatpush1.msra.mxu0 0.0
    %2710 = vmatprep.subr.mxu0 0.0
    %2711 = vmatpush1.msra.mxu0 0.0
    %2712 = vmatprep.subr.mxu0 0.0
    %2713 = vmatpush1.msra.mxu0 0.0
    %2714 = vmatprep.subr.mxu0 0.0
    %2715 = vmatpush1.msra.mxu0 0.0
    %2716 = vmatprep.mubr.f32.mxu0 0.0
    %2717 = vmatmul.mubr.f32.gmra.mrb[0].mxu0 %v2629
    %v2718 = vpop.f32.mrb[0].mxu0
    %v2719 = vadd.f32 0.0, %v2718
    %v2720 = vpop.f32.mrb[0].mxu0
    %2721 = vmatprep.mubr.f32.mxu0 0.0
    %2722 = vmatmul.mubr.f32.gmra.mrb[0].mxu0 %v2632
    %v2723 = vpop.f32.mrb[0].mxu0
    %v2724 = vadd.f32 0.0, %v2723
    %v2725 = vpop.f32.mrb[0].mxu0
    %2726 = vmatprep.mubr.f32.mxu0 0.0
    %2727 = vmatmul.mubr.f32.gmra.mrb[0].mxu0 %v2635
    %v2728 = vpop.f32.mrb[0].mxu0
    %v2729 = vadd.f32 0.0, %v2728
    %v2730 = vpop.f32.mrb[0].mxu0
    %2731 = vmatprep.mubr.f32.mxu0 0.0
    %2732 = vmatmul.mubr.f32.gmra.mrb[0].mxu0 %v2638
    %v2733 = vpop.f32.mrb[0].mxu0
    %v2734 = vadd.f32 0.0, %v2733
    %v2735 = vpop.f32.mrb[0].mxu0
    %2736 = vmatprep.mubr.f32.mxu0 0.0
    %2737 = vmatmul.mubr.f32.gmra.mrb[0].mxu0 %v2641
    %v2738 = vpop.f32.mrb[0].mxu0
    %v2739 = vadd.f32 0.0, %v2738
    %v2740 = vpop.f32.mrb[0].mxu0
    %2741 = vmatprep.mubr.f32.mxu0 0.0
    %2742 = vmatmul.mubr.f32.gmra.mrb[0].mxu0 %v2644
    %v2743 = vpop.f32.mrb[0].mxu0
    %v2744 = vadd.f32 0.0, %v2743
    %v2745 = vpop.f32.mrb[0].mxu0
    %2746 = vmatprep.mubr.f32.mxu0 0.0
    %2747 = vmatmul.mubr.f32.gmra.mrb[0].mxu0 %v2647
    %v2748 = vpop.f32.mrb[0].mxu0
    %v2749 = vadd.f32 0.0, %v2748
    %v2750 = vpop.f32.mrb[0].mxu0
    %2751 = vmatprep.mubr.f32.mxu0 0.0
    %2752 = vmatmul.mubr.f32.gmra.mrb[0].mxu0 %v2650
    %v2753 = vpop.f32.mrb[0].mxu0
    %v2754 = vadd.f32 0.0, %v2753
    %v2755 = vpop.f32.mrb[0].mxu0
    %2756 = vdwg.mxu0
    %v2758 = vsel %vm248, %v2178, 0
    %v2761 = vsel %vm248, %v2180, 0
    %v2764 = vsel %vm248, %v2182, 0
    %v2767 = vsel %vm248, %v2184, 0
    %v2770 = vsel %vm248, %v2186, 0
    %v2773 = vsel %vm248, %v2188, 0
    %v2776 = vsel %vm248, %v2190, 0
    %v2779 = vsel %vm248, %v2192, 0
    %2781 = vmatprep.subr.mxu0 0.0
    %2782 = vmatpush1.msra.mxu0 %v216
    %2783 = vmatprep.subr.mxu0 0.0
    %2784 = vmatpush1.msra.mxu0 %v217
    %2785 = vmatprep.subr.mxu0 0.0
    %2786 = vmatpush1.msra.mxu0 %v218
    %2787 = vmatprep.subr.mxu0 0.0
    %2788 = vmatpush1.msra.mxu0 %v219
    %2789 = vmatprep.subr.mxu0 0.0
    %2790 = vmatpush1.msra.mxu0 %v220
    %2791 = vmatprep.subr.mxu0 0.0
    %2792 = vmatpush1.msra.mxu0 %v221
    %2793 = vmatprep.subr.mxu0 0.0
    %2794 = vmatpush1.msra.mxu0 %v222
    %2795 = vmatprep.subr.mxu0 0.0
    %2796 = vmatpush1.msra.mxu0 %v223
    %2797 = vmatprep.subr.mxu0 0.0
    %2798 = vmatpush1.msra.mxu0 0.0
    %2799 = vmatprep.subr.mxu0 0.0
    %2800 = vmatpush1.msra.mxu0 0.0
    %2801 = vmatprep.subr.mxu0 0.0
    %2802 = vmatpush1.msra.mxu0 0.0
    %2803 = vmatprep.subr.mxu0 0.0
    %2804 = vmatpush1.msra.mxu0 0.0
    %2805 = vmatprep.subr.mxu0 0.0
    %2806 = vmatpush1.msra.mxu0 0.0
    %2807 = vmatprep.subr.mxu0 0.0
    %2808 = vmatpush1.msra.mxu0 0.0
    %2809 = vmatprep.subr.mxu0 0.0
    %2810 = vmatpush1.msra.mxu0 0.0
    %2811 = vmatprep.subr.mxu0 0.0
    %2812 = vmatpush1.msra.mxu0 0.0
    %2813 = vmatprep.subr.mxu0 0.0
    %2814 = vmatpush1.msra.mxu0 0.0
    %2815 = vmatprep.subr.mxu0 0.0
    %2816 = vmatpush1.msra.mxu0 0.0
    %2817 = vmatprep.subr.mxu0 0.0
    %2818 = vmatpush1.msra.mxu0 0.0
    %2819 = vmatprep.subr.mxu0 0.0
    %2820 = vmatpush1.msra.mxu0 0.0
    %2821 = vmatprep.subr.mxu0 0.0
    %2822 = vmatpush1.msra.mxu0 0.0
    %2823 = vmatprep.subr.mxu0 0.0
    %2824 = vmatpush1.msra.mxu0 0.0
    %2825 = vmatprep.subr.mxu0 0.0
    %2826 = vmatpush1.msra.mxu0 0.0
    %2827 = vmatprep.subr.mxu0 0.0
    %2828 = vmatpush1.msra.mxu0 0.0
    %2829 = vmatprep.subr.mxu0 0.0
    %2830 = vmatpush1.msra.mxu0 0.0
    %2831 = vmatprep.subr.mxu0 0.0
    %2832 = vmatpush1.msra.mxu0 0.0
    %2833 = vmatprep.subr.mxu0 0.0
    %2834 = vmatpush1.msra.mxu0 0.0
    %2835 = vmatprep.subr.mxu0 0.0
    %2836 = vmatpush1.msra.mxu0 0.0
    %2837 = vmatprep.subr.mxu0 0.0
    %2838 = vmatpush1.msra.mxu0 0.0
    %2839 = vmatprep.subr.mxu0 0.0
    %2840 = vmatpush1.msra.mxu0 0.0
    %2841 = vmatprep.subr.mxu0 0.0
    %2842 = vmatpush1.msra.mxu0 0.0
    %2843 = vmatprep.subr.mxu0 0.0
    %2844 = vmatpush1.msra.mxu0 0.0
    %2845 = vmatprep.mubr.f32.mxu0 0.0
    %2846 = vmatmul.mubr.f32.gmra.mrb[0].mxu0 %v2758
    %v2847 = vpop.f32.mrb[0].mxu0
    %v2848 = vadd.f32 0.0, %v2847
    %v2849 = vpop.f32.mrb[0].mxu0
    %2850 = vmatprep.mubr.f32.mxu0 0.0
    %2851 = vmatmul.mubr.f32.gmra.mrb[0].mxu0 %v2761
    %v2852 = vpop.f32.mrb[0].mxu0
    %v2853 = vadd.f32 0.0, %v2852
    %v2854 = vpop.f32.mrb[0].mxu0
    %2855 = vmatprep.mubr.f32.mxu0 0.0
    %2856 = vmatmul.mubr.f32.gmra.mrb[0].mxu0 %v2764
    %v2857 = vpop.f32.mrb[0].mxu0
    %v2858 = vadd.f32 0.0, %v2857
    %v2859 = vpop.f32.mrb[0].mxu0
    %2860 = vmatprep.mubr.f32.mxu0 0.0
    %2861 = vmatmul.mubr.f32.gmra.mrb[0].mxu0 %v2767
    %v2862 = vpop.f32.mrb[0].mxu0
    %v2863 = vadd.f32 0.0, %v2862
    %v2864 = vpop.f32.mrb[0].mxu0
    %2865 = vmatprep.mubr.f32.mxu0 0.0
    %2866 = vmatmul.mubr.f32.gmra.mrb[0].mxu0 %v2770
    %v2867 = vpop.f32.mrb[0].mxu0
    %v2868 = vadd.f32 0.0, %v2867
    %v2869 = vpop.f32.mrb[0].mxu0
    %2870 = vmatprep.mubr.f32.mxu0 0.0
    %2871 = vmatmul.mubr.f32.gmra.mrb[0].mxu0 %v2773
    %v2872 = vpop.f32.mrb[0].mxu0
    %v2873 = vadd.f32 0.0, %v2872
    %v2874 = vpop.f32.mrb[0].mxu0
    %2875 = vmatprep.mubr.f32.mxu0 0.0
    %2876 = vmatmul.mubr.f32.gmra.mrb[0].mxu0 %v2776
    %v2877 = vpop.f32.mrb[0].mxu0
    %v2878 = vadd.f32 0.0, %v2877
    %v2879 = vpop.f32.mrb[0].mxu0
    %2880 = vmatprep.mubr.f32.mxu0 0.0
    %2881 = vmatmul.mubr.f32.gmra.mrb[0].mxu0 %v2779
    %v2882 = vpop.f32.mrb[0].mxu0
    %v2883 = vadd.f32 0.0, %v2882
    %v2884 = vpop.f32.mrb[0].mxu0
    %2885 = vdwg.mxu0
    %v2887 = vsel %vm248, %v2194, 0
    %v2890 = vsel %vm248, %v2196, 0
    %v2893 = vsel %vm248, %v2198, 0
    %v2896 = vsel %vm248, %v2200, 0
    %v2899 = vsel %vm248, %v2202, 0
    %v2902 = vsel %vm248, %v2204, 0
    %v2905 = vsel %vm248, %v2206, 0
    %v2908 = vsel %vm248, %v2208, 0
    %2910 = vmatprep.subr.mxu0 0.0
    %2911 = vmatpush1.msra.mxu0 %v224
    %2912 = vmatprep.subr.mxu0 0.0
    %2913 = vmatpush1.msra.mxu0 %v225
    %2914 = vmatprep.subr.mxu0 0.0
    %2915 = vmatpush1.msra.mxu0 %v226
    %2916 = vmatprep.subr.mxu0 0.0
    %2917 = vmatpush1.msra.mxu0 %v227
    %2918 = vmatprep.subr.mxu0 0.0
    %2919 = vmatpush1.msra.mxu0 %v228
    %2920 = vmatprep.subr.mxu0 0.0
    %2921 = vmatpush1.msra.mxu0 %v229
    %2922 = vmatprep.subr.mxu0 0.0
    %2923 = vmatpush1.msra.mxu0 %v230
    %2924 = vmatprep.subr.mxu0 0.0
    %2925 = vmatpush1.msra.mxu0 %v231
    %2926 = vmatprep.subr.mxu0 0.0
    %2927 = vmatpush1.msra.mxu0 0.0
    %2928 = vmatprep.subr.mxu0 0.0
    %2929 = vmatpush1.msra.mxu0 0.0
    %2930 = vmatprep.subr.mxu0 0.0
    %2931 = vmatpush1.msra.mxu0 0.0
    %2932 = vmatprep.subr.mxu0 0.0
    %2933 = vmatpush1.msra.mxu0 0.0
    %2934 = vmatprep.subr.mxu0 0.0
    %2935 = vmatpush1.msra.mxu0 0.0
    %2936 = vmatprep.subr.mxu0 0.0
    %2937 = vmatpush1.msra.mxu0 0.0
    %2938 = vmatprep.subr.mxu0 0.0
    %2939 = vmatpush1.msra.mxu0 0.0
    %2940 = vmatprep.subr.mxu0 0.0
    %2941 = vmatpush1.msra.mxu0 0.0
    %2942 = vmatprep.subr.mxu0 0.0
    %2943 = vmatpush1.msra.mxu0 0.0
    %2944 = vmatprep.subr.mxu0 0.0
    %2945 = vmatpush1.msra.mxu0 0.0
    %2946 = vmatprep.subr.mxu0 0.0
    %2947 = vmatpush1.msra.mxu0 0.0
    %2948 = vmatprep.subr.mxu0 0.0
    %2949 = vmatpush1.msra.mxu0 0.0
    %2950 = vmatprep.subr.mxu0 0.0
    %2951 = vmatpush1.msra.mxu0 0.0
    %2952 = vmatprep.subr.mxu0 0.0
    %2953 = vmatpush1.msra.mxu0 0.0
    %2954 = vmatprep.subr.mxu0 0.0
    %2955 = vmatpush1.msra.mxu0 0.0
    %2956 = vmatprep.subr.mxu0 0.0
    %2957 = vmatpush1.msra.mxu0 0.0
    %2958 = vmatprep.subr.mxu0 0.0
    %2959 = vmatpush1.msra.mxu0 0.0
    %2960 = vmatprep.subr.mxu0 0.0
    %2961 = vmatpush1.msra.mxu0 0.0
    %2962 = vmatprep.subr.mxu0 0.0
    %2963 = vmatpush1.msra.mxu0 0.0
    %2964 = vmatprep.subr.mxu0 0.0
    %2965 = vmatpush1.msra.mxu0 0.0
    %2966 = vmatprep.subr.mxu0 0.0
    %2967 = vmatpush1.msra.mxu0 0.0
    %2968 = vmatprep.subr.mxu0 0.0
    %2969 = vmatpush1.msra.mxu0 0.0
    %2970 = vmatprep.subr.mxu0 0.0
    %2971 = vmatpush1.msra.mxu0 0.0
    %2972 = vmatprep.subr.mxu0 0.0
    %2973 = vmatpush1.msra.mxu0 0.0
    %2974 = vmatprep.mubr.f32.mxu0 0.0
    %2975 = vmatmul.mubr.f32.gmra.mrb[0].mxu0 %v2887
    %v2976 = vpop.f32.mrb[0].mxu0
    %v2977 = vadd.f32 0.0, %v2976
    %v2978 = vpop.f32.mrb[0].mxu0
    %2979 = vmatprep.mubr.f32.mxu0 0.0
    %2980 = vmatmul.mubr.f32.gmra.mrb[0].mxu0 %v2890
    %v2981 = vpop.f32.mrb[0].mxu0
    %v2982 = vadd.f32 0.0, %v2981
    %v2983 = vpop.f32.mrb[0].mxu0
    %2984 = vmatprep.mubr.f32.mxu0 0.0
    %2985 = vmatmul.mubr.f32.gmra.mrb[0].mxu0 %v2893
    %v2986 = vpop.f32.mrb[0].mxu0
    %v2987 = vadd.f32 0.0, %v2986
    %v2988 = vpop.f32.mrb[0].mxu0
    %2989 = vmatprep.mubr.f32.mxu0 0.0
    %2990 = vmatmul.mubr.f32.gmra.mrb[0].mxu0 %v2896
    %v2991 = vpop.f32.mrb[0].mxu0
    %v2992 = vadd.f32 0.0, %v2991
    %v2993 = vpop.f32.mrb[0].mxu0
    %2994 = vmatprep.mubr.f32.mxu0 0.0
    %2995 = vmatmul.mubr.f32.gmra.mrb[0].mxu0 %v2899
    %v2996 = vpop.f32.mrb[0].mxu0
    %v2997 = vadd.f32 0.0, %v2996
    %v2998 = vpop.f32.mrb[0].mxu0
    %2999 = vmatprep.mubr.f32.mxu0 0.0
    %3000 = vmatmul.mubr.f32.gmra.mrb[0].mxu0 %v2902
    %v3001 = vpop.f32.mrb[0].mxu0
    %v3002 = vadd.f32 0.0, %v3001
    %v3003 = vpop.f32.mrb[0].mxu0
    %3004 = vmatprep.mubr.f32.mxu0 0.0
    %3005 = vmatmul.mubr.f32.gmra.mrb[0].mxu0 %v2905
    %v3006 = vpop.f32.mrb[0].mxu0
    %v3007 = vadd.f32 0.0, %v3006
    %v3008 = vpop.f32.mrb[0].mxu0
    %3009 = vmatprep.mubr.f32.mxu0 0.0
    %3010 = vmatmul.mubr.f32.gmra.mrb[0].mxu0 %v2908
    %v3011 = vpop.f32.mrb[0].mxu0
    %v3012 = vadd.f32 0.0, %v3011
    %v3013 = vpop.f32.mrb[0].mxu0
    %3014 = vdwg.mxu0
    %v3016 = vsel %vm248, %v2210, 0
    %v3019 = vsel %vm248, %v2212, 0
    %v3022 = vsel %vm248, %v2214, 0
    %v3025 = vsel %vm248, %v2216, 0
    %v3028 = vsel %vm248, %v2218, 0
    %v3031 = vsel %vm248, %v2220, 0
    %v3034 = vsel %vm248, %v2222, 0
    %v3037 = vsel %vm248, %v2224, 0
    %3039 = vmatprep.subr.mxu0 0.0
    %3040 = vmatpush1.msra.mxu0 %v232
    %3041 = vmatprep.subr.mxu0 0.0
    %3042 = vmatpush1.msra.mxu0 %v233
    %3043 = vmatprep.subr.mxu0 0.0
    %3044 = vmatpush1.msra.mxu0 %v234
    %3045 = vmatprep.subr.mxu0 0.0
    %3046 = vmatpush1.msra.mxu0 %v235
    %3047 = vmatprep.subr.mxu0 0.0
    %3048 = vmatpush1.msra.mxu0 %v236
    %3049 = vmatprep.subr.mxu0 0.0
    %3050 = vmatpush1.msra.mxu0 %v237
    %3051 = vmatprep.subr.mxu0 0.0
    %3052 = vmatpush1.msra.mxu0 %v238
    %3053 = vmatprep.subr.mxu0 0.0
    %3054 = vmatpush1.msra.mxu0 %v239
    %3055 = vmatprep.subr.mxu0 0.0
    %3056 = vmatpush1.msra.mxu0 0.0
    %3057 = vmatprep.subr.mxu0 0.0
    %3058 = vmatpush1.msra.mxu0 0.0
    %3059 = vmatprep.subr.mxu0 0.0
    %3060 = vmatpush1.msra.mxu0 0.0
    %3061 = vmatprep.subr.mxu0 0.0
    %3062 = vmatpush1.msra.mxu0 0.0
    %3063 = vmatprep.subr.mxu0 0.0
    %3064 = vmatpush1.msra.mxu0 0.0
    %3065 = vmatprep.subr.mxu0 0.0
    %3066 = vmatpush1.msra.mxu0 0.0
    %3067 = vmatprep.subr.mxu0 0.0
    %3068 = vmatpush1.msra.mxu0 0.0
    %3069 = vmatprep.subr.mxu0 0.0
    %3070 = vmatpush1.msra.mxu0 0.0
    %3071 = vmatprep.subr.mxu0 0.0
    %3072 = vmatpush1.msra.mxu0 0.0
    %3073 = vmatprep.subr.mxu0 0.0
    %3074 = vmatpush1.msra.mxu0 0.0
    %3075 = vmatprep.subr.mxu0 0.0
    %3076 = vmatpush1.msra.mxu0 0.0
    %3077 = vmatprep.subr.mxu0 0.0
    %3078 = vmatpush1.msra.mxu0 0.0
    %3079 = vmatprep.subr.mxu0 0.0
    %3080 = vmatpush1.msra.mxu0 0.0
    %3081 = vmatprep.subr.mxu0 0.0
    %3082 = vmatpush1.msra.mxu0 0.0
    %3083 = vmatprep.subr.mxu0 0.0
    %3084 = vmatpush1.msra.mxu0 0.0
    %3085 = vmatprep.subr.mxu0 0.0
    %3086 = vmatpush1.msra.mxu0 0.0
    %3087 = vmatprep.subr.mxu0 0.0
    %3088 = vmatpush1.msra.mxu0 0.0
    %3089 = vmatprep.subr.mxu0 0.0
    %3090 = vmatpush1.msra.mxu0 0.0
    %3091 = vmatprep.subr.mxu0 0.0
    %3092 = vmatpush1.msra.mxu0 0.0
    %3093 = vmatprep.subr.mxu0 0.0
    %3094 = vmatpush1.msra.mxu0 0.0
    %3095 = vmatprep.subr.mxu0 0.0
    %3096 = vmatpush1.msra.mxu0 0.0
    %3097 = vmatprep.subr.mxu0 0.0
    %3098 = vmatpush1.msra.mxu0 0.0
    %3099 = vmatprep.subr.mxu0 0.0
    %3100 = vmatpush1.msra.mxu0 0.0
    %3101 = vmatprep.subr.mxu0 0.0
    %3102 = vmatpush1.msra.mxu0 0.0
    %3103 = vmatprep.mubr.f32.mxu0 0.0
    %3104 = vmatmul.mubr.f32.gmra.mrb[0].mxu0 %v3016
    %v3105 = vpop.f32.mrb[0].mxu0
    %v3106 = vadd.f32 0.0, %v3105
    %v3107 = vpop.f32.mrb[0].mxu0
    %3108 = vmatprep.mubr.f32.mxu0 0.0
    %3109 = vmatmul.mubr.f32.gmra.mrb[0].mxu0 %v3019
    %v3110 = vpop.f32.mrb[0].mxu0
    %v3111 = vadd.f32 0.0, %v3110
    %v3112 = vpop.f32.mrb[0].mxu0
    %3113 = vmatprep.mubr.f32.mxu0 0.0
    %3114 = vmatmul.mubr.f32.gmra.mrb[0].mxu0 %v3022
    %v3115 = vpop.f32.mrb[0].mxu0
    %v3116 = vadd.f32 0.0, %v3115
    %v3117 = vpop.f32.mrb[0].mxu0
    %3118 = vmatprep.mubr.f32.mxu0 0.0
    %3119 = vmatmul.mubr.f32.gmra.mrb[0].mxu0 %v3025
    %v3120 = vpop.f32.mrb[0].mxu0
    %v3121 = vadd.f32 0.0, %v3120
    %v3122 = vpop.f32.mrb[0].mxu0
    %3123 = vmatprep.mubr.f32.mxu0 0.0
    %3124 = vmatmul.mubr.f32.gmra.mrb[0].mxu0 %v3028
    %v3125 = vpop.f32.mrb[0].mxu0
    %v3126 = vadd.f32 0.0, %v3125
    %v3127 = vpop.f32.mrb[0].mxu0
    %3128 = vmatprep.mubr.f32.mxu0 0.0
    %3129 = vmatmul.mubr.f32.gmra.mrb[0].mxu0 %v3031
    %v3130 = vpop.f32.mrb[0].mxu0
    %v3131 = vadd.f32 0.0, %v3130
    %v3132 = vpop.f32.mrb[0].mxu0
    %3133 = vmatprep.mubr.f32.mxu0 0.0
    %3134 = vmatmul.mubr.f32.gmra.mrb[0].mxu0 %v3034
    %v3135 = vpop.f32.mrb[0].mxu0
    %v3136 = vadd.f32 0.0, %v3135
    %v3137 = vpop.f32.mrb[0].mxu0
    %3138 = vmatprep.mubr.f32.mxu0 0.0
    %3139 = vmatmul.mubr.f32.gmra.mrb[0].mxu0 %v3037
    %v3140 = vpop.f32.mrb[0].mxu0
    %v3141 = vadd.f32 0.0, %v3140
    %v3142 = vpop.f32.mrb[0].mxu0
    %3143 = vdwg.mxu0
    %v3145 = vsel %vm248, %v2226, 0
    %v3148 = vsel %vm248, %v2228, 0
    %v3151 = vsel %vm248, %v2230, 0
    %v3154 = vsel %vm248, %v2232, 0
    %v3157 = vsel %vm248, %v2234, 0
    %v3160 = vsel %vm248, %v2236, 0
    %v3163 = vsel %vm248, %v2238, 0
    %v3166 = vsel %vm248, %v2240, 0
    %3168 = vmatprep.subr.mxu0 0.0
    %3169 = vmatpush1.msra.mxu0 %v240
    %3170 = vmatprep.subr.mxu0 0.0
    %3171 = vmatpush1.msra.mxu0 %v241
    %3172 = vmatprep.subr.mxu0 0.0
    %3173 = vmatpush1.msra.mxu0 %v242
    %3174 = vmatprep.subr.mxu0 0.0
    %3175 = vmatpush1.msra.mxu0 %v243
    %3176 = vmatprep.subr.mxu0 0.0
    %3177 = vmatpush1.msra.mxu0 %v244
    %3178 = vmatprep.subr.mxu0 0.0
    %3179 = vmatpush1.msra.mxu0 %v245
    %3180 = vmatprep.subr.mxu0 0.0
    %3181 = vmatpush1.msra.mxu0 %v246
    %3182 = vmatprep.subr.mxu0 0.0
    %3183 = vmatpush1.msra.mxu0 %v247
    %3184 = vmatprep.subr.mxu0 0.0
    %3185 = vmatpush1.msra.mxu0 0.0
    %3186 = vmatprep.subr.mxu0 0.0
    %3187 = vmatpush1.msra.mxu0 0.0
    %3188 = vmatprep.subr.mxu0 0.0
    %3189 = vmatpush1.msra.mxu0 0.0
    %3190 = vmatprep.subr.mxu0 0.0
    %3191 = vmatpush1.msra.mxu0 0.0
    %3192 = vmatprep.subr.mxu0 0.0
    %3193 = vmatpush1.msra.mxu0 0.0
    %3194 = vmatprep.subr.mxu0 0.0
    %3195 = vmatpush1.msra.mxu0 0.0
    %3196 = vmatprep.subr.mxu0 0.0
    %3197 = vmatpush1.msra.mxu0 0.0
    %3198 = vmatprep.subr.mxu0 0.0
    %3199 = vmatpush1.msra.mxu0 0.0
    %3200 = vmatprep.subr.mxu0 0.0
    %3201 = vmatpush1.msra.mxu0 0.0
    %3202 = vmatprep.subr.mxu0 0.0
    %3203 = vmatpush1.msra.mxu0 0.0
    %3204 = vmatprep.subr.mxu0 0.0
    %3205 = vmatpush1.msra.mxu0 0.0
    %3206 = vmatprep.subr.mxu0 0.0
    %3207 = vmatpush1.msra.mxu0 0.0
    %3208 = vmatprep.subr.mxu0 0.0
    %3209 = vmatpush1.msra.mxu0 0.0
    %3210 = vmatprep.subr.mxu0 0.0
    %3211 = vmatpush1.msra.mxu0 0.0
    %3212 = vmatprep.subr.mxu0 0.0
    %3213 = vmatpush1.msra.mxu0 0.0
    %3214 = vmatprep.subr.mxu0 0.0
    %3215 = vmatpush1.msra.mxu0 0.0
    %3216 = vmatprep.subr.mxu0 0.0
    %3217 = vmatpush1.msra.mxu0 0.0
    %3218 = vmatprep.subr.mxu0 0.0
    %3219 = vmatpush1.msra.mxu0 0.0
    %3220 = vmatprep.subr.mxu0 0.0
    %3221 = vmatpush1.msra.mxu0 0.0
    %3222 = vmatprep.subr.mxu0 0.0
    %3223 = vmatpush1.msra.mxu0 0.0
    %3224 = vmatprep.subr.mxu0 0.0
    %3225 = vmatpush1.msra.mxu0 0.0
    %3226 = vmatprep.subr.mxu0 0.0
    %3227 = vmatpush1.msra.mxu0 0.0
    %3228 = vmatprep.subr.mxu0 0.0
    %3229 = vmatpush1.msra.mxu0 0.0
    %3230 = vmatprep.subr.mxu0 0.0
    %3231 = vmatpush1.msra.mxu0 0.0
    %3232 = vmatprep.mubr.f32.mxu0 0.0
    %3233 = vmatmul.mubr.f32.gmra.mrb[0].mxu0 %v3145
    %v3234 = vpop.f32.mrb[0].mxu0
    %v3235 = vadd.f32 0.0, %v3234
    %v3236 = vpop.f32.mrb[0].mxu0
    %3237 = vmatprep.mubr.f32.mxu0 0.0
    %3238 = vmatmul.mubr.f32.gmra.mrb[0].mxu0 %v3148
    %v3239 = vpop.f32.mrb[0].mxu0
    %v3240 = vadd.f32 0.0, %v3239
    %v3241 = vpop.f32.mrb[0].mxu0
    %3242 = vmatprep.mubr.f32.mxu0 0.0
    %3243 = vmatmul.mubr.f32.gmra.mrb[0].mxu0 %v3151
    %v3244 = vpop.f32.mrb[0].mxu0
    %v3245 = vadd.f32 0.0, %v3244
    %v3246 = vpop.f32.mrb[0].mxu0
    %3247 = vmatprep.mubr.f32.mxu0 0.0
    %3248 = vmatmul.mubr.f32.gmra.mrb[0].mxu0 %v3154
    %v3249 = vpop.f32.mrb[0].mxu0
    %v3250 = vadd.f32 0.0, %v3249
    %v3251 = vpop.f32.mrb[0].mxu0
    %3252 = vmatprep.mubr.f32.mxu0 0.0
    %3253 = vmatmul.mubr.f32.gmra.mrb[0].mxu0 %v3157
    %v3254 = vpop.f32.mrb[0].mxu0
    %v3255 = vadd.f32 0.0, %v3254
    %v3256 = vpop.f32.mrb[0].mxu0
    %3257 = vmatprep.mubr.f32.mxu0 0.0
    %3258 = vmatmul.mubr.f32.gmra.mrb[0].mxu0 %v3160
    %v3259 = vpop.f32.mrb[0].mxu0
    %v3260 = vadd.f32 0.0, %v3259
    %v3261 = vpop.f32.mrb[0].mxu0
    %3262 = vmatprep.mubr.f32.mxu0 0.0
    %3263 = vmatmul.mubr.f32.gmra.mrb[0].mxu0 %v3163
    %v3264 = vpop.f32.mrb[0].mxu0
    %v3265 = vadd.f32 0.0, %v3264
    %v3266 = vpop.f32.mrb[0].mxu0
    %3267 = vmatprep.mubr.f32.mxu0 0.0
    %3268 = vmatmul.mubr.f32.gmra.mrb[0].mxu0 %v3166
    %v3269 = vpop.f32.mrb[0].mxu0
    %v3270 = vadd.f32 0.0, %v3269
    %v3271 = vpop.f32.mrb[0].mxu0
    %3272 = vdwg.mxu0
    %3273 = vst.msk [vmem:[#allocation8] sm:$0xff] %vm248, %v2332
    %3274 = vst.msk [vmem:[#allocation8 + $0x8] sm:$0xff] %vm248, %v2337
    %3275 = vst.msk [vmem:[#allocation8 + $0x10] sm:$0xff] %vm248, %v2342
    %3276 = vst.msk [vmem:[#allocation8 + $0x18] sm:$0xff] %vm248, %v2347
    %3277 = vst.msk [vmem:[#allocation8 + $0x20] sm:$0xff] %vm248, %v2352
    %3278 = vst.msk [vmem:[#allocation8 + $0x28] sm:$0xff] %vm248, %v2357
    %3279 = vst.msk [vmem:[#allocation8 + $0x30] sm:$0xff] %vm248, %v2362
    %3280 = vst.msk [vmem:[#allocation8 + $0x38] sm:$0xff] %vm248, %v2367
    %3281 = vst.msk [vmem:[#allocation8 + $0x40] sm:$0xff] %vm248, %v2461
    %3282 = vst.msk [vmem:[#allocation8 + $0x48] sm:$0xff] %vm248, %v2466
    %3283 = vst.msk [vmem:[#allocation8 + $0x50] sm:$0xff] %vm248, %v2471
    %3284 = vst.msk [vmem:[#allocation8 + $0x58] sm:$0xff] %vm248, %v2476
    %3285 = vst.msk [vmem:[#allocation8 + $0x60] sm:$0xff] %vm248, %v2481
    %3286 = vst.msk [vmem:[#allocation8 + $0x68] sm:$0xff] %vm248, %v2486
    %3287 = vst.msk [vmem:[#allocation8 + $0x70] sm:$0xff] %vm248, %v2491
    %3288 = vst.msk [vmem:[#allocation8 + $0x78] sm:$0xff] %vm248, %v2496
    %3289 = vst.msk [vmem:[#allocation8 + $0x80] sm:$0xff] %vm248, %v2590
    %3290 = vst.msk [vmem:[#allocation8 + $0x88] sm:$0xff] %vm248, %v2595
    %3291 = vst.msk [vmem:[#allocation8 + $0x90] sm:$0xff] %vm248, %v2600
    %3292 = vst.msk [vmem:[#allocation8 + $0x98] sm:$0xff] %vm248, %v2605
    %3293 = vst.msk [vmem:[#allocation8 + $0xa0] sm:$0xff] %vm248, %v2610
    %3294 = vst.msk [vmem:[#allocation8 + $0xa8] sm:$0xff] %vm248, %v2615
    %3295 = vst.msk [vmem:[#allocation8 + $0xb0] sm:$0xff] %vm248, %v2620
    %3296 = vst.msk [vmem:[#allocation8 + $0xb8] sm:$0xff] %vm248, %v2625
    %3297 = vst.msk [vmem:[#allocation8 + $0xc0] sm:$0xff] %vm248, %v2719
    %3298 = vst.msk [vmem:[#allocation8 + $0xc8] sm:$0xff] %vm248, %v2724
    %3299 = vst.msk [vmem:[#allocation8 + $0xd0] sm:$0xff] %vm248, %v2729
    %3300 = vst.msk [vmem:[#allocation8 + $0xd8] sm:$0xff] %vm248, %v2734
    %3301 = vst.msk [vmem:[#allocation8 + $0xe0] sm:$0xff] %vm248, %v2739
    %3302 = vst.msk [vmem:[#allocation8 + $0xe8] sm:$0xff] %vm248, %v2744
    %3303 = vst.msk [vmem:[#allocation8 + $0xf0] sm:$0xff] %vm248, %v2749
    %3304 = vst.msk [vmem:[#allocation8 + $0xf8] sm:$0xff] %vm248, %v2754
    %3305 = vst.msk [vmem:[#allocation8 + $0x100] sm:$0xff] %vm248, %v2848
    %3306 = vst.msk [vmem:[#allocation8 + $0x108] sm:$0xff] %vm248, %v2853
    %3307 = vst.msk [vmem:[#allocation8 + $0x110] sm:$0xff] %vm248, %v2858
    %3308 = vst.msk [vmem:[#allocation8 + $0x118] sm:$0xff] %vm248, %v2863
    %3309 = vst.msk [vmem:[#allocation8 + $0x120] sm:$0xff] %vm248, %v2868
    %3310 = vst.msk [vmem:[#allocation8 + $0x128] sm:$0xff] %vm248, %v2873
    %3311 = vst.msk [vmem:[#allocation8 + $0x130] sm:$0xff] %vm248, %v2878
    %3312 = vst.msk [vmem:[#allocation8 + $0x138] sm:$0xff] %vm248, %v2883
    %3313 = vst.msk [vmem:[#allocation8 + $0x140] sm:$0xff] %vm248, %v2977
    %3314 = vst.msk [vmem:[#allocation8 + $0x148] sm:$0xff] %vm248, %v2982
    %3315 = vst.msk [vmem:[#allocation8 + $0x150] sm:$0xff] %vm248, %v2987
    %3316 = vst.msk [vmem:[#allocation8 + $0x158] sm:$0xff] %vm248, %v2992
    %3317 = vst.msk [vmem:[#allocation8 + $0x160] sm:$0xff] %vm248, %v2997
    %3318 = vst.msk [vmem:[#allocation8 + $0x168] sm:$0xff] %vm248, %v3002
    %3319 = vst.msk [vmem:[#allocation8 + $0x170] sm:$0xff] %vm248, %v3007
    %3320 = vst.msk [vmem:[#allocation8 + $0x178] sm:$0xff] %vm248, %v3012
    %3321 = vst.msk [vmem:[#allocation8 + $0x180] sm:$0xff] %vm248, %v3106
    %3322 = vst.msk [vmem:[#allocation8 + $0x188] sm:$0xff] %vm248, %v3111
    %3323 = vst.msk [vmem:[#allocation8 + $0x190] sm:$0xff] %vm248, %v3116
    %3324 = vst.msk [vmem:[#allocation8 + $0x198] sm:$0xff] %vm248, %v3121
    %3325 = vst.msk [vmem:[#allocation8 + $0x1a0] sm:$0xff] %vm248, %v3126
    %3326 = vst.msk [vmem:[#allocation8 + $0x1a8] sm:$0xff] %vm248, %v3131
    %3327 = vst.msk [vmem:[#allocation8 + $0x1b0] sm:$0xff] %vm248, %v3136
    %3328 = vst.msk [vmem:[#allocation8 + $0x1b8] sm:$0xff] %vm248, %v3141
    %3329 = vst.msk [vmem:[#allocation8 + $0x1c0] sm:$0xff] %vm248, %v3235
    %3330 = vst.msk [vmem:[#allocation8 + $0x1c8] sm:$0xff] %vm248, %v3240
    %3331 = vst.msk [vmem:[#allocation8 + $0x1d0] sm:$0xff] %vm248, %v3245
    %3332 = vst.msk [vmem:[#allocation8 + $0x1d8] sm:$0xff] %vm248, %v3250
    %3333 = vst.msk [vmem:[#allocation8 + $0x1e0] sm:$0xff] %vm248, %v3255
    %3334 = vst.msk [vmem:[#allocation8 + $0x1e8] sm:$0xff] %vm248, %v3260
    %3335 = vst.msk [vmem:[#allocation8 + $0x1f0] sm:$0xff] %vm248, %v3265
    %3336 = vst.msk [vmem:[#allocation8 + $0x1f8] sm:$0xff] %vm248, %v3270
    // Predicated region
    $region26: #{tpu_custom_call.1} parent=1 // pred_check
      _
    $region27: #{tpu_custom_call.1} parent=1 // pred_check_branch
      %3338 = sbr.rel (0) target = $region29
    $region28: #{tpu_custom_call.1} parent=1 // pred_region
      %s3340 = ssub.s32 8192, 8192
      %3341 = vsyncadd [#allocation4], %s3340
      %s3342 = sshll.u32 [#allocation8], 4
      %s3343 = int_to_ptr.vmem [resolvable:$true] %s3342
      %3348 = dma.vmem_to_hbm [thread:$0]  %s3343, 8192, %s3, [#allocation4], 128, 128, 8
    $region29: #{tpu_custom_call.1} parent=1 // pred_fallthru
      _
    // Predicated region
    $region30: #{tpu_custom_call.1} parent=1 // pred_check
      _
    $region31: #{tpu_custom_call.1} parent=1 // pred_check_branch
      %3350 = sbr.rel (0) target = $region33
    $region32: #{tpu_custom_call.1} parent=1 // pred_region
      %3351 = dma.done [#allocation4], 8192
    $region33: #{tpu_custom_call.1} parent=1 // pred_fallthru
      _
    %3352 = vsyncpa [#allocation3], 1
    %3353 = vsyncpa [#allocation6], 1
    %3354 = vsyncpa [#allocation4], 1

</llo_original>
